<compile_context>
chip_gen: v7x
topology: tpu7x:2x2x1
jax: 0.10.0
libtpu: 0.0.40
codegen_flags: <defaults>
</compile_context>

<pallas_src>
import functools

import jax
import jax.numpy as jnp
from jax import lax
from jax.experimental import pallas as pl
from jax.experimental.pallas import tpu as pltpu

P_DROP = 0.3
LEAKY_SLOPE = 0.2
PAD_OUT = 128  # lane-dense padded width for the final layer / output


def _round_up(n, m):
    return (n + m - 1) // m * m


def _leaky_relu(v):
    return jnp.where(v > 0, v, LEAKY_SLOPE * v)


def _dropout(v, seed_u32, layer_id, row_off_u32):
    """Inverted dropout with a counter-based hash PRNG (pure jnp integer ops).

    keep-prob = 1 - P_DROP; kept values scaled by 1/(1-P_DROP). The keep
    decision is made directly on uint32 bits (no float conversion).
    """
    rows = lax.broadcasted_iota(jnp.int32, v.shape, 0).astype(jnp.uint32) + row_off_u32
    cols = lax.broadcasted_iota(jnp.int32, v.shape, 1).astype(jnp.uint32)
    h = rows * jnp.uint32(0x9E3779B1) + cols * jnp.uint32(0x85EBCA77)
    h = h ^ (seed_u32 + jnp.uint32(layer_id) * jnp.uint32(0xC2B2AE3D))
    # splitmix32-style finalizer
    h = h ^ (h >> 16)
    h = h * jnp.uint32(0x7FEB352D)
    h = h ^ (h >> 15)
    h = h * jnp.uint32(0x846CA68B)
    h = h ^ (h >> 16)
    keep = h >= jnp.uint32(int(P_DROP * (1 << 32)))  # P(keep) = 1 - P_DROP
    return jnp.where(keep, v * (1.0 / (1.0 - P_DROP)), 0.0)


def _disc_kernel(tb,
                 seed_ref, x_ref,
                 w1_ref, b1_ref,
                 w2_ref, b2_ref,
                 w3_ref, b3_ref,
                 w4_ref, b4_ref,
                 out_ref):
    seed_u32 = seed_ref[0].astype(jnp.uint32)
    # per-batch-tile row offset so different grid steps draw different masks
    row_off = (pl.program_id(0) * tb).astype(jnp.uint32)

    x = x_ref[...]

    h = jnp.dot(x, w1_ref[...].astype(jnp.float32),
                preferred_element_type=jnp.float32) + b1_ref[...]
    h = _dropout(_leaky_relu(h), seed_u32, 1, row_off)

    h = jnp.dot(h, w2_ref[...].astype(jnp.float32),
                preferred_element_type=jnp.float32) + b2_ref[...]
    h = _dropout(_leaky_relu(h), seed_u32, 2, row_off)

    h = jnp.dot(h, w3_ref[...].astype(jnp.float32),
                preferred_element_type=jnp.float32) + b3_ref[...]
    h = _dropout(_leaky_relu(h), seed_u32, 3, row_off)

    logits = jnp.dot(h, w4_ref[...].astype(jnp.float32),
                     preferred_element_type=jnp.float32) + b4_ref[...]
    out_ref[...] = jax.nn.sigmoid(logits)


def discriminator_forward(x, params, seed):
    """x: (B, input_size) float32. Returns (B, n_class) float32."""
    B, in_features = x.shape
    n_class = params["n_class"]

    # Pad batch to a sublane-friendly multiple and pick a batch tile.
    padded_b = _round_up(max(B, 1), 8)
    tb = min(256, padded_b)
    padded_b = _round_up(padded_b, tb)
    if padded_b != B:
        x = jnp.pad(x, ((0, padded_b - B), (0, 0)))

    grid = (padded_b // tb,)
    seed_arr = jnp.asarray([seed], dtype=jnp.int32)

    w1, b1 = params["w1"], params["b1"]
    w2, b2 = params["w2"], params["b2"]
    w3, b3 = params["w3"], params["b3"]
    w4, b4 = params["w4"], params["b4"]  # already padded to PAD_OUT columns

    def resident(shape):
        # same block index every grid step -> stays resident in VMEM
        return pl.BlockSpec(shape, lambda i: (0, 0))

    flops = 2 * padded_b * (in_features * 1024 + 1024 * 512 + 512 * 256
                            + 256 * PAD_OUT)
    bytes_accessed = (
        sum(int(a.size) * int(a.dtype.itemsize)
            for a in (w1, w2, w3, w4, b1, b2, b3, b4))
        + int(x.size) * 4 + padded_b * PAD_OUT * 4)

    out = pl.pallas_call(
        functools.partial(_disc_kernel, tb),
        grid=grid,
        out_shape=jax.ShapeDtypeStruct((padded_b, PAD_OUT), jnp.float32),
        in_specs=[
            pl.BlockSpec(memory_space=pltpu.MemorySpace.SMEM),   # seed (scalar)
            pl.BlockSpec((tb, in_features), lambda i: (i, 0)),   # x, batch-tiled
            resident(w1.shape), resident(b1.shape),
            resident(w2.shape), resident(b2.shape),
            resident(w3.shape), resident(b3.shape),
            resident(w4.shape), resident(b4.shape),
        ],
        out_specs=pl.BlockSpec((tb, PAD_OUT), lambda i: (i, 0)),
        compiler_params=pltpu.CompilerParams(
            dimension_semantics=("parallel",)),
        cost_estimate=pl.CostEstimate(
            flops=flops,
            transcendentals=padded_b * PAD_OUT,
            bytes_accessed=bytes_accessed),
    )(seed_arr, x, w1, b1, w2, b2, w3, b3, w4, b4)

    return out[:B, :n_class]


def init_params(key, input_size=32, n_class=10):
    """Mirrors nn.Linear default init (U[-1/sqrt(fan_in), 1/sqrt(fan_in)]).
    Weights stored transposed vs. PyTorch, i.e. (in, out), as bfloat16;
    biases (1, out) float32. Final layer padded to PAD_OUT zero columns."""
    dims = [(input_size, 1024), (1024, 512), (512, 256), (256, n_class)]
    params = {"n_class": n_class}
    for i, (fin, fout) in enumerate(dims, start=1):
        key, kw, kb = jax.random.split(key, 3)
        bound = 1.0 / (fin ** 0.5)
        w = jax.random.uniform(kw, (fin, fout), jnp.float32, -bound, bound)
        b = jax.random.uniform(kb, (1, fout), jnp.float32, -bound, bound)
        if i == len(dims):
            w = jnp.pad(w, ((0, 0), (0, PAD_OUT - fout)))
            b = jnp.pad(b, ((0, 0), (0, PAD_OUT - fout)))
        params[f"w{i}"] = w.astype(jnp.bfloat16)
        params[f"b{i}"] = b
    return params


if __name__ == "__main__":
    key = jax.random.PRNGKey(0)
    key, kx, kp = jax.random.split(key, 3)

    B, INPUT_SIZE, N_CLASS = 8, 32, 10
    x = jax.random.normal(kx, (B, INPUT_SIZE), dtype=jnp.float32)
    params = init_params(kp, input_size=INPUT_SIZE, n_class=N_CLASS)

    out = discriminator_forward(x, params, seed=1234)
    out = jax.block_until_ready(out)

    assert out.shape == (B, N_CLASS)
    assert bool(jnp.all(jnp.isfinite(out)))
    assert bool(jnp.all(out >= 0.0)) and bool(jnp.all(out <= 1.0))
    print("KERNEL_OK")
</pallas_src>

<mosaic_0001>
module attributes {stable_mosaic.version = 11 : i64} {
  func.func @_disc_kernel(%arg0: i32, %arg1: memref<1xi32, #tpu.memory_space<smem>>, %arg2: memref<8x32xf32, #tpu.memory_space<vmem>>, %arg3: memref<32x1024xbf16, #tpu.memory_space<vmem>>, %arg4: memref<1x1024xf32, #tpu.memory_space<vmem>>, %arg5: memref<1024x512xbf16, #tpu.memory_space<vmem>>, %arg6: memref<1x512xf32, #tpu.memory_space<vmem>>, %arg7: memref<512x256xbf16, #tpu.memory_space<vmem>>, %arg8: memref<1x256xf32, #tpu.memory_space<vmem>>, %arg9: memref<256x128xbf16, #tpu.memory_space<vmem>>, %arg10: memref<1x128xf32, #tpu.memory_space<vmem>>, %arg11: memref<8x128xf32, #tpu.memory_space<vmem>>) attributes {dimension_semantics = [#tpu.dimension_semantics<parallel>], iteration_bounds = array<i64: 1>, scalar_prefetch = 0 : i64, scratch_operands = 0 : i64, tpu.core_type = #tpu.core_type<tc>, window_params = [{transform_indices = @transform_0, window_bounds = array<i64: 1>}, {transform_indices = @transform_1, window_bounds = array<i64: 8, 32>}, {pipeline_mode = #tpu.pipeline_mode<synchronous>, transform_indices = @transform_2, window_bounds = array<i64: 32, 1024>}, {pipeline_mode = #tpu.pipeline_mode<synchronous>, transform_indices = @transform_3, window_bounds = array<i64: 1, 1024>}, {pipeline_mode = #tpu.pipeline_mode<synchronous>, transform_indices = @transform_4, window_bounds = array<i64: 1024, 512>}, {pipeline_mode = #tpu.pipeline_mode<synchronous>, transform_indices = @transform_5, window_bounds = array<i64: 1, 512>}, {pipeline_mode = #tpu.pipeline_mode<synchronous>, transform_indices = @transform_6, window_bounds = array<i64: 512, 256>}, {pipeline_mode = #tpu.pipeline_mode<synchronous>, transform_indices = @transform_7, window_bounds = array<i64: 1, 256>}, {pipeline_mode = #tpu.pipeline_mode<synchronous>, transform_indices = @transform_8, window_bounds = array<i64: 256, 128>}, {pipeline_mode = #tpu.pipeline_mode<synchronous>, transform_indices = @transform_9, window_bounds = array<i64: 1, 128>}, {transform_indices = @transform_10, window_bounds = array<i64: 8, 128>}]} {
    %c0 = arith.constant 0 : index
    %0 = memref.load %arg1[%c0] : memref<1xi32, #tpu.memory_space<smem>>
    %c8_i32 = arith.constant 8 : i32
    %1 = arith.muli %arg0, %c8_i32 : i32
    %c0_0 = arith.constant 0 : index
    %c0_1 = arith.constant 0 : index
    %2 = vector.load %arg2[%c0_0, %c0_1] : memref<8x32xf32, #tpu.memory_space<vmem>>, vector<8x32xf32>
    %c0_2 = arith.constant 0 : index
    %c0_3 = arith.constant 0 : index
    %3 = vector.load %arg3[%c0_2, %c0_3] : memref<32x1024xbf16, #tpu.memory_space<vmem>>, vector<32x1024xbf16>
    %4 = arith.extf %3 : vector<32x1024xbf16> to vector<32x1024xf32>
    %cst = arith.constant dense<0.000000e+00> : vector<8x1024xf32>
    %5 = tpu.matmul %2, %4, %cst {dimension_numbers = #tpu.dot_dimension_numbers<[1], [0], [0], [1], [0, 0, 1, 1], [], []>} : vector<8x32xf32>, vector<32x1024xf32>, vector<8x1024xf32> -> vector<8x1024xf32>
    %c0_4 = arith.constant 0 : index
    %c0_5 = arith.constant 0 : index
    %6 = vector.load %arg4[%c0_4, %c0_5] : memref<1x1024xf32, #tpu.memory_space<vmem>>, vector<1x1024xf32>
    %7 = vector.broadcast %6 : vector<1x1024xf32> to vector<8x1024xf32>
    %8 = arith.addf %5, %7 : vector<8x1024xf32>
    %cst_6 = arith.constant 0.000000e+00 : f32
    %9 = vector.broadcast %cst_6 : f32 to vector<8x1024xf32>
    %10 = arith.cmpf ogt, %8, %9 : vector<8x1024xf32>
    %cst_7 = arith.constant 2.000000e-01 : f32
    %11 = vector.broadcast %cst_7 : f32 to vector<8x1024xf32>
    %12 = arith.mulf %11, %8 : vector<8x1024xf32>
    %13 = arith.select %10, %8, %12 : vector<8x1024xi1>, vector<8x1024xf32>
    %14 = tpu.iota {dimensions = array<i32: 0>} : vector<8x1024xi32>
    %15 = vector.broadcast %1 : i32 to vector<8x1024xi32>
    %16 = arith.addi %14, %15 : vector<8x1024xi32>
    %17 = tpu.iota {dimensions = array<i32: 1>} : vector<8x1024xi32>
    %c-1640531535_i32 = arith.constant -1640531535 : i32
    %18 = vector.broadcast %c-1640531535_i32 : i32 to vector<8x1024xi32>
    %19 = arith.muli %16, %18 : vector<8x1024xi32>
    %c-2048144777_i32 = arith.constant -2048144777 : i32
    %20 = vector.broadcast %c-2048144777_i32 : i32 to vector<8x1024xi32>
    %21 = arith.muli %17, %20 : vector<8x1024xi32>
    %22 = arith.addi %19, %21 : vector<8x1024xi32>
    %c1_i32 = arith.constant 1 : i32
    %c-1028477379_i32 = arith.constant -1028477379 : i32
    %23 = arith.muli %c1_i32, %c-1028477379_i32 : i32
    %24 = arith.addi %0, %23 : i32
    %25 = vector.broadcast %24 : i32 to vector<8x1024xi32>
    %26 = arith.xori %22, %25 : vector<8x1024xi32>
    %c16_i32 = arith.constant 16 : i32
    %27 = vector.broadcast %c16_i32 : i32 to vector<8x1024xi32>
    %28 = arith.shrui %26, %27 : vector<8x1024xi32>
    %29 = arith.xori %26, %28 : vector<8x1024xi32>
    %c2146121005_i32 = arith.constant 2146121005 : i32
    %30 = vector.broadcast %c2146121005_i32 : i32 to vector<8x1024xi32>
    %31 = arith.muli %29, %30 : vector<8x1024xi32>
    %c15_i32 = arith.constant 15 : i32
    %32 = vector.broadcast %c15_i32 : i32 to vector<8x1024xi32>
    %33 = arith.shrui %31, %32 : vector<8x1024xi32>
    %34 = arith.xori %31, %33 : vector<8x1024xi32>
    %c-2073254261_i32 = arith.constant -2073254261 : i32
    %35 = vector.broadcast %c-2073254261_i32 : i32 to vector<8x1024xi32>
    %36 = arith.muli %34, %35 : vector<8x1024xi32>
    %c16_i32_8 = arith.constant 16 : i32
    %37 = vector.broadcast %c16_i32_8 : i32 to vector<8x1024xi32>
    %38 = arith.shrui %36, %37 : vector<8x1024xi32>
    %39 = arith.xori %36, %38 : vector<8x1024xi32>
    %c1288490188_i32 = arith.constant 1288490188 : i32
    %40 = vector.broadcast %c1288490188_i32 : i32 to vector<8x1024xi32>
    %41 = arith.cmpi uge, %39, %40 : vector<8x1024xi32>
    %cst_9 = arith.constant 1.42857146 : f32
    %42 = vector.broadcast %cst_9 : f32 to vector<8x1024xf32>
    %43 = arith.mulf %13, %42 : vector<8x1024xf32>
    %cst_10 = arith.constant 0.000000e+00 : f32
    %44 = vector.broadcast %cst_10 : f32 to vector<8x1024xf32>
    %45 = arith.select %41, %43, %44 : vector<8x1024xi1>, vector<8x1024xf32>
    %c0_11 = arith.constant 0 : index
    %c0_12 = arith.constant 0 : index
    %46 = vector.load %arg5[%c0_11, %c0_12] : memref<1024x512xbf16, #tpu.memory_space<vmem>>, vector<1024x512xbf16>
    %47 = arith.extf %46 : vector<1024x512xbf16> to vector<1024x512xf32>
    %cst_13 = arith.constant dense<0.000000e+00> : vector<8x512xf32>
    %48 = tpu.matmul %45, %47, %cst_13 {dimension_numbers = #tpu.dot_dimension_numbers<[1], [0], [0], [1], [0, 0, 1, 1], [], []>} : vector<8x1024xf32>, vector<1024x512xf32>, vector<8x512xf32> -> vector<8x512xf32>
    %c0_14 = arith.constant 0 : index
    %c0_15 = arith.constant 0 : index
    %49 = vector.load %arg6[%c0_14, %c0_15] : memref<1x512xf32, #tpu.memory_space<vmem>>, vector<1x512xf32>
    %50 = vector.broadcast %49 : vector<1x512xf32> to vector<8x512xf32>
    %51 = arith.addf %48, %50 : vector<8x512xf32>
    %cst_16 = arith.constant 0.000000e+00 : f32
    %52 = vector.broadcast %cst_16 : f32 to vector<8x512xf32>
    %53 = arith.cmpf ogt, %51, %52 : vector<8x512xf32>
    %cst_17 = arith.constant 2.000000e-01 : f32
    %54 = vector.broadcast %cst_17 : f32 to vector<8x512xf32>
    %55 = arith.mulf %54, %51 : vector<8x512xf32>
    %56 = arith.select %53, %51, %55 : vector<8x512xi1>, vector<8x512xf32>
    %57 = tpu.iota {dimensions = array<i32: 0>} : vector<8x512xi32>
    %58 = vector.broadcast %1 : i32 to vector<8x512xi32>
    %59 = arith.addi %57, %58 : vector<8x512xi32>
    %60 = tpu.iota {dimensions = array<i32: 1>} : vector<8x512xi32>
    %c-1640531535_i32_18 = arith.constant -1640531535 : i32
    %61 = vector.broadcast %c-1640531535_i32_18 : i32 to vector<8x512xi32>
    %62 = arith.muli %59, %61 : vector<8x512xi32>
    %c-2048144777_i32_19 = arith.constant -2048144777 : i32
    %63 = vector.broadcast %c-2048144777_i32_19 : i32 to vector<8x512xi32>
    %64 = arith.muli %60, %63 : vector<8x512xi32>
    %65 = arith.addi %62, %64 : vector<8x512xi32>
    %c2_i32 = arith.constant 2 : i32
    %c-1028477379_i32_20 = arith.constant -1028477379 : i32
    %66 = arith.muli %c2_i32, %c-1028477379_i32_20 : i32
    %67 = arith.addi %0, %66 : i32
    %68 = vector.broadcast %67 : i32 to vector<8x512xi32>
    %69 = arith.xori %65, %68 : vector<8x512xi32>
    %c16_i32_21 = arith.constant 16 : i32
    %70 = vector.broadcast %c16_i32_21 : i32 to vector<8x512xi32>
    %71 = arith.shrui %69, %70 : vector<8x512xi32>
    %72 = arith.xori %69, %71 : vector<8x512xi32>
    %c2146121005_i32_22 = arith.constant 2146121005 : i32
    %73 = vector.broadcast %c2146121005_i32_22 : i32 to vector<8x512xi32>
    %74 = arith.muli %72, %73 : vector<8x512xi32>
    %c15_i32_23 = arith.constant 15 : i32
    %75 = vector.broadcast %c15_i32_23 : i32 to vector<8x512xi32>
    %76 = arith.shrui %74, %75 : vector<8x512xi32>
    %77 = arith.xori %74, %76 : vector<8x512xi32>
    %c-2073254261_i32_24 = arith.constant -2073254261 : i32
    %78 = vector.broadcast %c-2073254261_i32_24 : i32 to vector<8x512xi32>
    %79 = arith.muli %77, %78 : vector<8x512xi32>
    %c16_i32_25 = arith.constant 16 : i32
    %80 = vector.broadcast %c16_i32_25 : i32 to vector<8x512xi32>
    %81 = arith.shrui %79, %80 : vector<8x512xi32>
    %82 = arith.xori %79, %81 : vector<8x512xi32>
    %c1288490188_i32_26 = arith.constant 1288490188 : i32
    %83 = vector.broadcast %c1288490188_i32_26 : i32 to vector<8x512xi32>
    %84 = arith.cmpi uge, %82, %83 : vector<8x512xi32>
    %cst_27 = arith.constant 1.42857146 : f32
    %85 = vector.broadcast %cst_27 : f32 to vector<8x512xf32>
    %86 = arith.mulf %56, %85 : vector<8x512xf32>
    %cst_28 = arith.constant 0.000000e+00 : f32
    %87 = vector.broadcast %cst_28 : f32 to vector<8x512xf32>
    %88 = arith.select %84, %86, %87 : vector<8x512xi1>, vector<8x512xf32>
    %c0_29 = arith.constant 0 : index
    %c0_30 = arith.constant 0 : index
    %89 = vector.load %arg7[%c0_29, %c0_30] : memref<512x256xbf16, #tpu.memory_space<vmem>>, vector<512x256xbf16>
    %90 = arith.extf %89 : vector<512x256xbf16> to vector<512x256xf32>
    %cst_31 = arith.constant dense<0.000000e+00> : vector<8x256xf32>
    %91 = tpu.matmul %88, %90, %cst_31 {dimension_numbers = #tpu.dot_dimension_numbers<[1], [0], [0], [1], [0, 0, 1, 1], [], []>} : vector<8x512xf32>, vector<512x256xf32>, vector<8x256xf32> -> vector<8x256xf32>
    %c0_32 = arith.constant 0 : index
    %c0_33 = arith.constant 0 : index
    %92 = vector.load %arg8[%c0_32, %c0_33] : memref<1x256xf32, #tpu.memory_space<vmem>>, vector<1x256xf32>
    %93 = vector.broadcast %92 : vector<1x256xf32> to vector<8x256xf32>
    %94 = arith.addf %91, %93 : vector<8x256xf32>
    %cst_34 = arith.constant 0.000000e+00 : f32
    %95 = vector.broadcast %cst_34 : f32 to vector<8x256xf32>
    %96 = arith.cmpf ogt, %94, %95 : vector<8x256xf32>
    %cst_35 = arith.constant 2.000000e-01 : f32
    %97 = vector.broadcast %cst_35 : f32 to vector<8x256xf32>
    %98 = arith.mulf %97, %94 : vector<8x256xf32>
    %99 = arith.select %96, %94, %98 : vector<8x256xi1>, vector<8x256xf32>
    %100 = tpu.iota {dimensions = array<i32: 0>} : vector<8x256xi32>
    %101 = vector.broadcast %1 : i32 to vector<8x256xi32>
    %102 = arith.addi %100, %101 : vector<8x256xi32>
    %103 = tpu.iota {dimensions = array<i32: 1>} : vector<8x256xi32>
    %c-1640531535_i32_36 = arith.constant -1640531535 : i32
    %104 = vector.broadcast %c-1640531535_i32_36 : i32 to vector<8x256xi32>
    %105 = arith.muli %102, %104 : vector<8x256xi32>
    %c-2048144777_i32_37 = arith.constant -2048144777 : i32
    %106 = vector.broadcast %c-2048144777_i32_37 : i32 to vector<8x256xi32>
    %107 = arith.muli %103, %106 : vector<8x256xi32>
    %108 = arith.addi %105, %107 : vector<8x256xi32>
    %c3_i32 = arith.constant 3 : i32
    %c-1028477379_i32_38 = arith.constant -1028477379 : i32
    %109 = arith.muli %c3_i32, %c-1028477379_i32_38 : i32
    %110 = arith.addi %0, %109 : i32
    %111 = vector.broadcast %110 : i32 to vector<8x256xi32>
    %112 = arith.xori %108, %111 : vector<8x256xi32>
    %c16_i32_39 = arith.constant 16 : i32
    %113 = vector.broadcast %c16_i32_39 : i32 to vector<8x256xi32>
    %114 = arith.shrui %112, %113 : vector<8x256xi32>
    %115 = arith.xori %112, %114 : vector<8x256xi32>
    %c2146121005_i32_40 = arith.constant 2146121005 : i32
    %116 = vector.broadcast %c2146121005_i32_40 : i32 to vector<8x256xi32>
    %117 = arith.muli %115, %116 : vector<8x256xi32>
    %c15_i32_41 = arith.constant 15 : i32
    %118 = vector.broadcast %c15_i32_41 : i32 to vector<8x256xi32>
    %119 = arith.shrui %117, %118 : vector<8x256xi32>
    %120 = arith.xori %117, %119 : vector<8x256xi32>
    %c-2073254261_i32_42 = arith.constant -2073254261 : i32
    %121 = vector.broadcast %c-2073254261_i32_42 : i32 to vector<8x256xi32>
    %122 = arith.muli %120, %121 : vector<8x256xi32>
    %c16_i32_43 = arith.constant 16 : i32
    %123 = vector.broadcast %c16_i32_43 : i32 to vector<8x256xi32>
    %124 = arith.shrui %122, %123 : vector<8x256xi32>
    %125 = arith.xori %122, %124 : vector<8x256xi32>
    %c1288490188_i32_44 = arith.constant 1288490188 : i32
    %126 = vector.broadcast %c1288490188_i32_44 : i32 to vector<8x256xi32>
    %127 = arith.cmpi uge, %125, %126 : vector<8x256xi32>
    %cst_45 = arith.constant 1.42857146 : f32
    %128 = vector.broadcast %cst_45 : f32 to vector<8x256xf32>
    %129 = arith.mulf %99, %128 : vector<8x256xf32>
    %cst_46 = arith.constant 0.000000e+00 : f32
    %130 = vector.broadcast %cst_46 : f32 to vector<8x256xf32>
    %131 = arith.select %127, %129, %130 : vector<8x256xi1>, vector<8x256xf32>
    %c0_47 = arith.constant 0 : index
    %c0_48 = arith.constant 0 : index
    %132 = vector.load %arg9[%c0_47, %c0_48] : memref<256x128xbf16, #tpu.memory_space<vmem>>, vector<256x128xbf16>
    %133 = arith.extf %132 : vector<256x128xbf16> to vector<256x128xf32>
    %cst_49 = arith.constant dense<0.000000e+00> : vector<8x128xf32>
    %134 = tpu.matmul %131, %133, %cst_49 {dimension_numbers = #tpu.dot_dimension_numbers<[1], [0], [0], [1], [0, 0, 1, 1], [], []>} : vector<8x256xf32>, vector<256x128xf32>, vector<8x128xf32> -> vector<8x128xf32>
    %c0_50 = arith.constant 0 : index
    %c0_51 = arith.constant 0 : index
    %135 = vector.load %arg10[%c0_50, %c0_51] : memref<1x128xf32, #tpu.memory_space<vmem>>, vector<1x128xf32>
    %136 = vector.broadcast %135 : vector<1x128xf32> to vector<8x128xf32>
    %137 = arith.addf %134, %136 : vector<8x128xf32>
    %138 = arith.negf %137 : vector<8x128xf32>
    %139 = math.exp %138 : vector<8x128xf32>
    %cst_52 = arith.constant 1.000000e+00 : f32
    %140 = vector.broadcast %cst_52 : f32 to vector<8x128xf32>
    %141 = arith.addf %140, %139 : vector<8x128xf32>
    %142 = arith.divf %140, %141 : vector<8x128xf32>
    %c0_53 = arith.constant 0 : index
    %c0_54 = arith.constant 0 : index
    %143 = vector.load %arg11[%c0_53, %c0_54] : memref<8x128xf32, #tpu.memory_space<vmem>>, vector<8x128xf32>
    tpu.vector_store %arg11[%c0_53, %c0_54], %142 {strides = array<i32>} : memref<8x128xf32, #tpu.memory_space<vmem>>, vector<8x128xf32>,
    return
  }
  func.func @transform_0(%arg0: i32) -> i32 {
    %c0_i32 = arith.constant 0 : i32
    %c0_i32_0 = arith.constant 0 : i32
    return %c0_i32 : i32
  }
  func.func @transform_1(%arg0: i32) -> (i32, i32) {
    %c0_i32 = arith.constant 0 : i32
    %c0_i32_0 = arith.constant 0 : i32
    return %arg0, %c0_i32 : i32, i32
  }
  func.func @transform_2(%arg0: i32) -> (i32, i32) {
    %c0_i32 = arith.constant 0 : i32
    %c0_i32_0 = arith.constant 0 : i32
    %c0_i32_1 = arith.constant 0 : i32
    return %c0_i32, %c0_i32_0 : i32, i32
  }
  func.func @transform_3(%arg0: i32) -> (i32, i32) {
    %c0_i32 = arith.constant 0 : i32
    %c0_i32_0 = arith.constant 0 : i32
    %c0_i32_1 = arith.constant 0 : i32
    return %c0_i32, %c0_i32_0 : i32, i32
  }
  func.func @transform_4(%arg0: i32) -> (i32, i32) {
    %c0_i32 = arith.constant 0 : i32
    %c0_i32_0 = arith.constant 0 : i32
    %c0_i32_1 = arith.constant 0 : i32
    return %c0_i32, %c0_i32_0 : i32, i32
  }
  func.func @transform_5(%arg0: i32) -> (i32, i32) {
    %c0_i32 = arith.constant 0 : i32
    %c0_i32_0 = arith.constant 0 : i32
    %c0_i32_1 = arith.constant 0 : i32
    return %c0_i32, %c0_i32_0 : i32, i32
  }
  func.func @transform_6(%arg0: i32) -> (i32, i32) {
    %c0_i32 = arith.constant 0 : i32
    %c0_i32_0 = arith.constant 0 : i32
    %c0_i32_1 = arith.constant 0 : i32
    return %c0_i32, %c0_i32_0 : i32, i32
  }
  func.func @transform_7(%arg0: i32) -> (i32, i32) {
    %c0_i32 = arith.constant 0 : i32
    %c0_i32_0 = arith.constant 0 : i32
    %c0_i32_1 = arith.constant 0 : i32
    return %c0_i32, %c0_i32_0 : i32, i32
  }
  func.func @transform_8(%arg0: i32) -> (i32, i32) {
    %c0_i32 = arith.constant 0 : i32
    %c0_i32_0 = arith.constant 0 : i32
    %c0_i32_1 = arith.constant 0 : i32
    return %c0_i32, %c0_i32_0 : i32, i32
  }
  func.func @transform_9(%arg0: i32) -> (i32, i32) {
    %c0_i32 = arith.constant 0 : i32
    %c0_i32_0 = arith.constant 0 : i32
    %c0_i32_1 = arith.constant 0 : i32
    return %c0_i32, %c0_i32_0 : i32, i32
  }
  func.func @transform_10(%arg0: i32) -> (i32, i32) {
    %c0_i32 = arith.constant 0 : i32
    %c0_i32_0 = arith.constant 0 : i32
    return %arg0, %c0_i32 : i32, i32
  }
}

</mosaic_0001>

<llo_original>
// kernel: tpu_custom_call.1
$region0: #{tpu_custom_call.1}
  #allocation0 [shape = 'u32[]', space=smem, size = 0x4, offset = 0x4, fixed_abs, tag = 'smem constant byte address 0x4 - core index']
  #allocation1 [shape = 'u32[144,128]{1,0:T(1,128)}', space=vmem, size = 0x12000, scoped, tag = 'internal scratch']
  #allocation2 [shape = 's32[1]{0:T(128)S(6)}', space=smem, size = 0x200, scoped, tag = 'scoped memory for tpu_custom_call.1']
  %s0 = inlined_call_operand.<no memory space> [shape: s32[1], index: 0, kind: input, shape index: {}]
  %s1 = inlined_call_operand.hbm [shape: f32[8,32], index: 1, kind: input, shape index: {}]
  %s2 = inlined_call_operand.hbm [shape: bf16[32,1024], index: 2, kind: input, shape index: {}]
  %s3 = inlined_call_operand.vmem [shape: f32[1,1024], index: 3, kind: input, shape index: {}]
  %s4 = inlined_call_operand.hbm [shape: bf16[1024,512], index: 4, kind: input, shape index: {}]
  %s5 = inlined_call_operand.vmem [shape: f32[1,512], index: 5, kind: input, shape index: {}]
  %s6 = inlined_call_operand.hbm [shape: bf16[512,256], index: 6, kind: input, shape index: {}]
  %s7 = inlined_call_operand.vmem [shape: f32[1,256], index: 7, kind: input, shape index: {}]
  %s8 = inlined_call_operand.hbm [shape: bf16[256,128], index: 8, kind: input, shape index: {}]
  %s9 = inlined_call_operand.vmem [shape: f32[1,128], index: 9, kind: input, shape index: {}]
  %s10 = inlined_call_operand.hbm [shape: f32[8,128], index: 10, kind: output, shape index: {}]
  %s11 = sld [smem:[#allocation0]]
  $region70: #{tpu_custom_call.1} parent=0
    _
  %s13 = ssub.s32 1, %s11
  %s14 = scalar_select 0, %s13, %s11
  %15 = sst [smem:[#allocation2]] %s0
  $region1: #{tpu_custom_call.1} parent=0
    #allocation3 [shape = 'u8[4096]{0}', space=vmem, size = 0x1000, scoped, tag = 'input window, operand 1, single buffered']
    #allocation4 [shape = 's32[1]{0}', space=sflag, size = 0x4, scoped, tag = 'scoped memory for tpu_custom_call.1']
    #allocation5 [shape = 's32[1]{0}', space=sflag, size = 0x4, scoped, tag = 'scoped memory for tpu_custom_call.1']
    #allocation6 [shape = 'u8[65536]{0}', space=vmem, size = 0x10000, scoped, tag = 'input window, operand 2, single buffered']
    #allocation7 [shape = 's32[1]{0}', space=sflag, size = 0x4, scoped, tag = 'scoped memory for tpu_custom_call.1']
    #allocation8 [shape = 'u8[1048576]{0}', space=vmem, size = 0x100000, scoped, tag = 'input window, operand 4, single buffered']
    #allocation9 [shape = 'u8[262144]{0}', space=vmem, size = 0x40000, scoped, tag = 'input window, operand 6, single buffered']
    #allocation10 [shape = 's32[1]{0}', space=sflag, size = 0x4, scoped, tag = 'scoped memory for tpu_custom_call.1']
    #allocation11 [shape = 'u8[65536]{0}', space=vmem, size = 0x10000, scoped, tag = 'input window, operand 8, single buffered']
    #allocation12 [shape = 'u8[4096]{0}', space=vmem, size = 0x1000, scoped, tag = 'output window, operand 0, single buffered']
    %16 = vsyncpa [#allocation4], 0
    %17 = vsyncpa [#allocation7], 0
    %18 = vsyncpa [#allocation10], 0
    %19 = vsyncpa [#allocation5], 0
    // Predicated region
    $region2: #{tpu_custom_call.1} parent=1 // pred_check
      _
    $region3: #{tpu_custom_call.1} parent=1 // pred_check_branch
      %21 = sbr.rel (0) target = $region5
    $region4: #{tpu_custom_call.1} parent=1 // pred_region
      _
    $region5: #{tpu_custom_call.1} parent=1 // pred_fallthru
      _
    // Predicated region
    $region6: #{tpu_custom_call.1} parent=1 // pred_check
      _
    $region7: #{tpu_custom_call.1} parent=1 // pred_check_branch
      %23 = sbr.rel (0) target = $region9
    $region8: #{tpu_custom_call.1} parent=1 // pred_region
      %s25 = ssub.s32 128, 128
      %26 = vsyncadd [#allocation4], %s25
      %s28 = sshll.u32 [#allocation3], 4
      %s29 = int_to_ptr.vmem [resolvable:$true] %s28
      %31 = dma.hbm_to_vmem [thread:$0]  %s1, 128, %s29, [#allocation4]
    $region9: #{tpu_custom_call.1} parent=1 // pred_fallthru
      _
    // Predicated region
    $region10: #{tpu_custom_call.1} parent=1 // pred_check
      _
    $region11: #{tpu_custom_call.1} parent=1 // pred_check_branch
      %33 = sbr.rel (0) target = $region13
    $region12: #{tpu_custom_call.1} parent=1 // pred_region
      %s35 = ssub.s32 2048, 2048
      %36 = vsyncadd [#allocation7], %s35
      %s37 = sshll.u32 [#allocation6], 4
      %s38 = int_to_ptr.vmem [resolvable:$true] %s37
      %43 = dma.hbm_to_vmem [thread:$0]  %s2, 2048, %s38, [#allocation7], 512, 512, 32
    $region13: #{tpu_custom_call.1} parent=1 // pred_fallthru
      _
    // Predicated region
    $region14: #{tpu_custom_call.1} parent=1 // pred_check
      _
    $region15: #{tpu_custom_call.1} parent=1 // pred_check_branch
      %45 = sbr.rel (0) target = $region17
    $region16: #{tpu_custom_call.1} parent=1 // pred_region
      _
    $region17: #{tpu_custom_call.1} parent=1 // pred_fallthru
      _
    // Predicated region
    $region18: #{tpu_custom_call.1} parent=1 // pred_check
      _
    $region19: #{tpu_custom_call.1} parent=1 // pred_check_branch
      %47 = sbr.rel (0) target = $region21
    $region20: #{tpu_custom_call.1} parent=1 // pred_region
      %s49 = ssub.s32 32768, 32768
      %50 = vsyncadd [#allocation7], %s49
      %s51 = sshll.u32 [#allocation8], 4
      %s52 = int_to_ptr.vmem [resolvable:$true] %s51
      %57 = dma.hbm_to_vmem [thread:$0]  %s4, 32768, %s52, [#allocation7], 256, 256, 16
    $region21: #{tpu_custom_call.1} parent=1 // pred_fallthru
      _
    // Predicated region
    $region22: #{tpu_custom_call.1} parent=1 // pred_check
      _
    $region23: #{tpu_custom_call.1} parent=1 // pred_check_branch
      %59 = sbr.rel (0) target = $region25
    $region24: #{tpu_custom_call.1} parent=1 // pred_region
      _
    $region25: #{tpu_custom_call.1} parent=1 // pred_fallthru
      _
    // Predicated region
    $region26: #{tpu_custom_call.1} parent=1 // pred_check
      _
    $region27: #{tpu_custom_call.1} parent=1 // pred_check_branch
      %61 = sbr.rel (0) target = $region29
    $region28: #{tpu_custom_call.1} parent=1 // pred_region
      %s63 = ssub.s32 8192, 8192
      %64 = vsyncadd [#allocation10], %s63
      %s65 = sshll.u32 [#allocation9], 4
      %s66 = int_to_ptr.vmem [resolvable:$true] %s65
      %71 = dma.hbm_to_vmem [thread:$0]  %s6, 8192, %s66, [#allocation10], 128, 128, 8
    $region29: #{tpu_custom_call.1} parent=1 // pred_fallthru
      _
    // Predicated region
    $region30: #{tpu_custom_call.1} parent=1 // pred_check
      _
    $region31: #{tpu_custom_call.1} parent=1 // pred_check_branch
      %73 = sbr.rel (0) target = $region33
    $region32: #{tpu_custom_call.1} parent=1 // pred_region
      _
    $region33: #{tpu_custom_call.1} parent=1 // pred_fallthru
      _
    // Predicated region
    $region34: #{tpu_custom_call.1} parent=1 // pred_check
      _
    $region35: #{tpu_custom_call.1} parent=1 // pred_check_branch
      %75 = sbr.rel (0) target = $region37
    $region36: #{tpu_custom_call.1} parent=1 // pred_region
      %s77 = ssub.s32 2048, 2048
      %78 = vsyncadd [#allocation10], %s77
      %s79 = sshll.u32 [#allocation11], 4
      %s80 = int_to_ptr.vmem [resolvable:$true] %s79
      %85 = dma.hbm_to_vmem [thread:$0]  %s8, 2048, %s80, [#allocation10], 64, 64, 4
    $region37: #{tpu_custom_call.1} parent=1 // pred_fallthru
      _
    // Predicated region
    $region38: #{tpu_custom_call.1} parent=1 // pred_check
      _
    $region39: #{tpu_custom_call.1} parent=1 // pred_check_branch
      %87 = sbr.rel (0) target = $region41
    $region40: #{tpu_custom_call.1} parent=1 // pred_region
      _
    $region41: #{tpu_custom_call.1} parent=1 // pred_fallthru
      _
    // Predicated region
    $region42: #{tpu_custom_call.1} parent=1 // pred_check
      _
    $region43: #{tpu_custom_call.1} parent=1 // pred_check_branch
      %89 = sbr.rel (0) target = $region45
    $region44: #{tpu_custom_call.1} parent=1 // pred_region
      %90 = dma.done [#allocation4], 128
    $region45: #{tpu_custom_call.1} parent=1 // pred_fallthru
      _
    // Predicated region
    $region46: #{tpu_custom_call.1} parent=1 // pred_check
      _
    $region47: #{tpu_custom_call.1} parent=1 // pred_check_branch
      %92 = sbr.rel (0) target = $region49
    $region48: #{tpu_custom_call.1} parent=1 // pred_region
      %93 = dma.done [#allocation7], 2048
    $region49: #{tpu_custom_call.1} parent=1 // pred_fallthru
      _
    // Predicated region
    $region50: #{tpu_custom_call.1} parent=1 // pred_check
      _
    $region51: #{tpu_custom_call.1} parent=1 // pred_check_branch
      %95 = sbr.rel (0) target = $region53
    $region52: #{tpu_custom_call.1} parent=1 // pred_region
      %96 = dma.done [#allocation7], 32768
    $region53: #{tpu_custom_call.1} parent=1 // pred_fallthru
      _
    // Predicated region
    $region54: #{tpu_custom_call.1} parent=1 // pred_check
      _
    $region55: #{tpu_custom_call.1} parent=1 // pred_check_branch
      %98 = sbr.rel (0) target = $region57
    $region56: #{tpu_custom_call.1} parent=1 // pred_region
      %99 = dma.done [#allocation10], 8192
    $region57: #{tpu_custom_call.1} parent=1 // pred_fallthru
      _
    // Predicated region
    $region58: #{tpu_custom_call.1} parent=1 // pred_check
      _
    $region59: #{tpu_custom_call.1} parent=1 // pred_check_branch
      %101 = sbr.rel (0) target = $region61
    $region60: #{tpu_custom_call.1} parent=1 // pred_region
      %102 = dma.done [#allocation10], 2048
    $region61: #{tpu_custom_call.1} parent=1 // pred_fallthru
      _
    %s103 = sld [smem:[#allocation2]]
    %s104 = smul.u32 0, 8
    %v105 = vld [vmem:[#allocation3] sm:$0xff]
    %v106 = vld [vmem:[#allocation6] sm:$0xff]
    %v107 = vld [vmem:[#allocation6 + $0x8] sm:$0xff]
    %v108 = vld [vmem:[#allocation6 + $0x10] sm:$0xff]
    %v109 = vld [vmem:[#allocation6 + $0x18] sm:$0xff]
    %v110 = vld [vmem:[#allocation6 + $0x20] sm:$0xff]
    %v111 = vld [vmem:[#allocation6 + $0x28] sm:$0xff]
    %v112 = vld [vmem:[#allocation6 + $0x30] sm:$0xff]
    %v113 = vld [vmem:[#allocation6 + $0x38] sm:$0xff]
    %v114 = vld [vmem:[#allocation6 + $0x40] sm:$0xff]
    %v115 = vld [vmem:[#allocation6 + $0x48] sm:$0xff]
    %v116 = vld [vmem:[#allocation6 + $0x50] sm:$0xff]
    %v117 = vld [vmem:[#allocation6 + $0x58] sm:$0xff]
    %v118 = vld [vmem:[#allocation6 + $0x60] sm:$0xff]
    %v119 = vld [vmem:[#allocation6 + $0x68] sm:$0xff]
    %v120 = vld [vmem:[#allocation6 + $0x70] sm:$0xff]
    %v121 = vld [vmem:[#allocation6 + $0x78] sm:$0xff]
    %v122 = vunpack.c.l.bf16 %v106
    %v123 = vunpack.c.h.bf16 %v106
    %v124 = vunpack.c.l.bf16 %v107
    %v125 = vunpack.c.h.bf16 %v107
    %v126 = vunpack.c.l.bf16 %v108
    %v127 = vunpack.c.h.bf16 %v108
    %v128 = vunpack.c.l.bf16 %v109
    %v129 = vunpack.c.h.bf16 %v109
    %v130 = vunpack.c.l.bf16 %v110
    %v131 = vunpack.c.h.bf16 %v110
    %v132 = vunpack.c.l.bf16 %v111
    %v133 = vunpack.c.h.bf16 %v111
    %v134 = vunpack.c.l.bf16 %v112
    %v135 = vunpack.c.h.bf16 %v112
    %v136 = vunpack.c.l.bf16 %v113
    %v137 = vunpack.c.h.bf16 %v113
    %v138 = vunpack.c.l.bf16 %v114
    %v139 = vunpack.c.h.bf16 %v114
    %v140 = vunpack.c.l.bf16 %v115
    %v141 = vunpack.c.h.bf16 %v115
    %v142 = vunpack.c.l.bf16 %v116
    %v143 = vunpack.c.h.bf16 %v116
    %v144 = vunpack.c.l.bf16 %v117
    %v145 = vunpack.c.h.bf16 %v117
    %v146 = vunpack.c.l.bf16 %v118
    %v147 = vunpack.c.h.bf16 %v118
    %v148 = vunpack.c.l.bf16 %v119
    %v149 = vunpack.c.h.bf16 %v119
    %v150 = vunpack.c.l.bf16 %v120
    %v151 = vunpack.c.h.bf16 %v120
    %v152 = vunpack.c.l.bf16 %v121
    %v153 = vunpack.c.h.bf16 %v121
    %v154 = vld [vmem:[%s3] sm:$0xff]
    %v156 = vlaneseq
    %v157 = vshrl.u32 %v156, 7
    %v158 = vsub.s32 0, %v157
    %v159 = vrot.slane %v154, %v158
    %v160 = vlaneseq
    %v161 = vshrl.u32 %v160, 7
    %v162 = vsub.s32 1, %v161
    %v163 = vrot.slane %v154, %v162
    %v164 = vlaneseq
    %v165 = vshrl.u32 %v164, 7
    %v166 = vsub.s32 2, %v165
    %v167 = vrot.slane %v154, %v166
    %v168 = vlaneseq
    %v169 = vshrl.u32 %v168, 7
    %v170 = vsub.s32 3, %v169
    %v171 = vrot.slane %v154, %v170
    %v172 = vlaneseq
    %v173 = vshrl.u32 %v172, 7
    %v174 = vsub.s32 4, %v173
    %v175 = vrot.slane %v154, %v174
    %v176 = vlaneseq
    %v177 = vshrl.u32 %v176, 7
    %v178 = vsub.s32 5, %v177
    %v179 = vrot.slane %v154, %v178
    %v180 = vlaneseq
    %v181 = vshrl.u32 %v180, 7
    %v182 = vsub.s32 6, %v181
    %v183 = vrot.slane %v154, %v182
    %v184 = vlaneseq
    %v185 = vshrl.u32 %v184, 7
    %v186 = vsub.s32 7, %v185
    %v187 = vrot.slane %v154, %v186
    %vm196 = vcmask 261120
    %v198 = vsel %vm196, %v105, 0
    %200 = vmatprep.subr.mxu0 %v123
    %201 = vmatpush1.msra.mxu0 %v122
    %202 = vmatprep.subr.mxu0 %v131
    %203 = vmatpush1.msra.mxu0 %v130
    %204 = vmatprep.subr.mxu0 %v139
    %205 = vmatpush1.msra.mxu0 %v138
    %206 = vmatprep.subr.mxu0 %v147
    %207 = vmatpush1.msra.mxu0 %v146
    %208 = vmatprep.subr.mxu0 0.0
    %209 = vmatpush1.msra.mxu0 0.0
    %210 = vmatprep.subr.mxu0 0.0
    %211 = vmatpush1.msra.mxu0 0.0
    %212 = vmatprep.subr.mxu0 0.0
    %213 = vmatpush1.msra.mxu0 0.0
    %214 = vmatprep.subr.mxu0 0.0
    %215 = vmatpush1.msra.mxu0 0.0
    %216 = vmatprep.subr.mxu0 0.0
    %217 = vmatpush1.msra.mxu0 0.0
    %218 = vmatprep.subr.mxu0 0.0
    %219 = vmatpush1.msra.mxu0 0.0
    %220 = vmatprep.subr.mxu0 0.0
    %221 = vmatpush1.msra.mxu0 0.0
    %222 = vmatprep.subr.mxu0 0.0
    %223 = vmatpush1.msra.mxu0 0.0
    %224 = vmatprep.subr.mxu0 0.0
    %225 = vmatpush1.msra.mxu0 0.0
    %226 = vmatprep.subr.mxu0 0.0
    %227 = vmatpush1.msra.mxu0 0.0
    %228 = vmatprep.subr.mxu0 0.0
    %229 = vmatpush1.msra.mxu0 0.0
    %230 = vmatprep.subr.mxu0 0.0
    %231 = vmatpush1.msra.mxu0 0.0
    %232 = vmatprep.subr.mxu0 0.0
    %233 = vmatpush1.msra.mxu0 0.0
    %234 = vmatprep.subr.mxu0 0.0
    %235 = vmatpush1.msra.mxu0 0.0
    %236 = vmatprep.subr.mxu0 0.0
    %237 = vmatpush1.msra.mxu0 0.0
    %238 = vmatprep.subr.mxu0 0.0
    %239 = vmatpush1.msra.mxu0 0.0
    %240 = vmatprep.subr.mxu0 0.0
    %241 = vmatpush1.msra.mxu0 0.0
    %242 = vmatprep.subr.mxu0 0.0
    %243 = vmatpush1.msra.mxu0 0.0
    %244 = vmatprep.subr.mxu0 0.0
    %245 = vmatpush1.msra.mxu0 0.0
    %246 = vmatprep.subr.mxu0 0.0
    %247 = vmatpush1.msra.mxu0 0.0
    %248 = vmatprep.subr.mxu0 0.0
    %249 = vmatpush1.msra.mxu0 0.0
    %250 = vmatprep.subr.mxu0 0.0
    %251 = vmatpush1.msra.mxu0 0.0
    %252 = vmatprep.subr.mxu0 0.0
    %253 = vmatpush1.msra.mxu0 0.0
    %254 = vmatprep.subr.mxu0 0.0
    %255 = vmatpush1.msra.mxu0 0.0
    %256 = vmatprep.subr.mxu0 0.0
    %257 = vmatpush1.msra.mxu0 0.0
    %258 = vmatprep.subr.mxu0 0.0
    %259 = vmatpush1.msra.mxu0 0.0
    %260 = vmatprep.subr.mxu0 0.0
    %261 = vmatpush1.msra.mxu0 0.0
    %262 = vmatprep.subr.mxu0 0.0
    %263 = vmatpush1.msra.mxu0 0.0
    %264 = vmatprep.mubr.f32.mxu0 0.0
    %265 = vmatmul.mubr.f32.gmra.mrb[0].mxu0 %v198
    %v266 = vpop.f32.mrb[0].mxu0
    %v267 = vadd.f32 %v159, %v266
    %v268 = vpop.f32.mrb[0].mxu0
    %v269 = vadd.f32 %v163, %v268
    %270 = vdwg.mxu0
    %271 = vmatprep.subr.mxu0 %v125
    %272 = vmatpush1.msra.mxu0 %v124
    %273 = vmatprep.subr.mxu0 %v133
    %274 = vmatpush1.msra.mxu0 %v132
    %275 = vmatprep.subr.mxu0 %v141
    %276 = vmatpush1.msra.mxu0 %v140
    %277 = vmatprep.subr.mxu0 %v149
    %278 = vmatpush1.msra.mxu0 %v148
    %279 = vmatprep.subr.mxu0 0.0
    %280 = vmatpush1.msra.mxu0 0.0
    %281 = vmatprep.subr.mxu0 0.0
    %282 = vmatpush1.msra.mxu0 0.0
    %283 = vmatprep.subr.mxu0 0.0
    %284 = vmatpush1.msra.mxu0 0.0
    %285 = vmatprep.subr.mxu0 0.0
    %286 = vmatpush1.msra.mxu0 0.0
    %287 = vmatprep.subr.mxu0 0.0
    %288 = vmatpush1.msra.mxu0 0.0
    %289 = vmatprep.subr.mxu0 0.0
    %290 = vmatpush1.msra.mxu0 0.0
    %291 = vmatprep.subr.mxu0 0.0
    %292 = vmatpush1.msra.mxu0 0.0
    %293 = vmatprep.subr.mxu0 0.0
    %294 = vmatpush1.msra.mxu0 0.0
    %295 = vmatprep.subr.mxu0 0.0
    %296 = vmatpush1.msra.mxu0 0.0
    %297 = vmatprep.subr.mxu0 0.0
    %298 = vmatpush1.msra.mxu0 0.0
    %299 = vmatprep.subr.mxu0 0.0
    %300 = vmatpush1.msra.mxu0 0.0
    %301 = vmatprep.subr.mxu0 0.0
    %302 = vmatpush1.msra.mxu0 0.0
    %303 = vmatprep.subr.mxu0 0.0
    %304 = vmatpush1.msra.mxu0 0.0
    %305 = vmatprep.subr.mxu0 0.0
    %306 = vmatpush1.msra.mxu0 0.0
    %307 = vmatprep.subr.mxu0 0.0
    %308 = vmatpush1.msra.mxu0 0.0
    %309 = vmatprep.subr.mxu0 0.0
    %310 = vmatpush1.msra.mxu0 0.0
    %311 = vmatprep.subr.mxu0 0.0
    %312 = vmatpush1.msra.mxu0 0.0
    %313 = vmatprep.subr.mxu0 0.0
    %314 = vmatpush1.msra.mxu0 0.0
    %315 = vmatprep.subr.mxu0 0.0
    %316 = vmatpush1.msra.mxu0 0.0
    %317 = vmatprep.subr.mxu0 0.0
    %318 = vmatpush1.msra.mxu0 0.0
    %319 = vmatprep.subr.mxu0 0.0
    %320 = vmatpush1.msra.mxu0 0.0
    %321 = vmatprep.subr.mxu0 0.0
    %322 = vmatpush1.msra.mxu0 0.0
    %323 = vmatprep.subr.mxu0 0.0
    %324 = vmatpush1.msra.mxu0 0.0
    %325 = vmatprep.subr.mxu0 0.0
    %326 = vmatpush1.msra.mxu0 0.0
    %327 = vmatprep.subr.mxu0 0.0
    %328 = vmatpush1.msra.mxu0 0.0
    %329 = vmatprep.subr.mxu0 0.0
    %330 = vmatpush1.msra.mxu0 0.0
    %331 = vmatprep.subr.mxu0 0.0
    %332 = vmatpush1.msra.mxu0 0.0
    %333 = vmatprep.subr.mxu0 0.0
    %334 = vmatpush1.msra.mxu0 0.0
    %335 = vmatprep.mubr.f32.mxu0 0.0
    %336 = vmatmul.mubr.f32.gmra.mrb[0].mxu0 %v198
    %v337 = vpop.f32.mrb[0].mxu0
    %v338 = vadd.f32 %v167, %v337
    %v339 = vpop.f32.mrb[0].mxu0
    %v340 = vadd.f32 %v171, %v339
    %341 = vdwg.mxu0
    %342 = vmatprep.subr.mxu0 %v127
    %343 = vmatpush1.msra.mxu0 %v126
    %344 = vmatprep.subr.mxu0 %v135
    %345 = vmatpush1.msra.mxu0 %v134
    %346 = vmatprep.subr.mxu0 %v143
    %347 = vmatpush1.msra.mxu0 %v142
    %348 = vmatprep.subr.mxu0 %v151
    %349 = vmatpush1.msra.mxu0 %v150
    %350 = vmatprep.subr.mxu0 0.0
    %351 = vmatpush1.msra.mxu0 0.0
    %352 = vmatprep.subr.mxu0 0.0
    %353 = vmatpush1.msra.mxu0 0.0
    %354 = vmatprep.subr.mxu0 0.0
    %355 = vmatpush1.msra.mxu0 0.0
    %356 = vmatprep.subr.mxu0 0.0
    %357 = vmatpush1.msra.mxu0 0.0
    %358 = vmatprep.subr.mxu0 0.0
    %359 = vmatpush1.msra.mxu0 0.0
    %360 = vmatprep.subr.mxu0 0.0
    %361 = vmatpush1.msra.mxu0 0.0
    %362 = vmatprep.subr.mxu0 0.0
    %363 = vmatpush1.msra.mxu0 0.0
    %364 = vmatprep.subr.mxu0 0.0
    %365 = vmatpush1.msra.mxu0 0.0
    %366 = vmatprep.subr.mxu0 0.0
    %367 = vmatpush1.msra.mxu0 0.0
    %368 = vmatprep.subr.mxu0 0.0
    %369 = vmatpush1.msra.mxu0 0.0
    %370 = vmatprep.subr.mxu0 0.0
    %371 = vmatpush1.msra.mxu0 0.0
    %372 = vmatprep.subr.mxu0 0.0
    %373 = vmatpush1.msra.mxu0 0.0
    %374 = vmatprep.subr.mxu0 0.0
    %375 = vmatpush1.msra.mxu0 0.0
    %376 = vmatprep.subr.mxu0 0.0
    %377 = vmatpush1.msra.mxu0 0.0
    %378 = vmatprep.subr.mxu0 0.0
    %379 = vmatpush1.msra.mxu0 0.0
    %380 = vmatprep.subr.mxu0 0.0
    %381 = vmatpush1.msra.mxu0 0.0
    %382 = vmatprep.subr.mxu0 0.0
    %383 = vmatpush1.msra.mxu0 0.0
    %384 = vmatprep.subr.mxu0 0.0
    %385 = vmatpush1.msra.mxu0 0.0
    %386 = vmatprep.subr.mxu0 0.0
    %387 = vmatpush1.msra.mxu0 0.0
    %388 = vmatprep.subr.mxu0 0.0
    %389 = vmatpush1.msra.mxu0 0.0
    %390 = vmatprep.subr.mxu0 0.0
    %391 = vmatpush1.msra.mxu0 0.0
    %392 = vmatprep.subr.mxu0 0.0
    %393 = vmatpush1.msra.mxu0 0.0
    %394 = vmatprep.subr.mxu0 0.0
    %395 = vmatpush1.msra.mxu0 0.0
    %396 = vmatprep.subr.mxu0 0.0
    %397 = vmatpush1.msra.mxu0 0.0
    %398 = vmatprep.subr.mxu0 0.0
    %399 = vmatpush1.msra.mxu0 0.0
    %400 = vmatprep.subr.mxu0 0.0
    %401 = vmatpush1.msra.mxu0 0.0
    %402 = vmatprep.subr.mxu0 0.0
    %403 = vmatpush1.msra.mxu0 0.0
    %404 = vmatprep.subr.mxu0 0.0
    %405 = vmatpush1.msra.mxu0 0.0
    %406 = vmatprep.mubr.f32.mxu0 0.0
    %407 = vmatmul.mubr.f32.gmra.mrb[0].mxu0 %v198
    %v408 = vpop.f32.mrb[0].mxu0
    %v409 = vadd.f32 %v175, %v408
    %v410 = vpop.f32.mrb[0].mxu0
    %v411 = vadd.f32 %v179, %v410
    %412 = vdwg.mxu0
    %413 = vmatprep.subr.mxu0 %v129
    %414 = vmatpush1.msra.mxu0 %v128
    %415 = vmatprep.subr.mxu0 %v137
    %416 = vmatpush1.msra.mxu0 %v136
    %417 = vmatprep.subr.mxu0 %v145
    %418 = vmatpush1.msra.mxu0 %v144
    %419 = vmatprep.subr.mxu0 %v153
    %420 = vmatpush1.msra.mxu0 %v152
    %421 = vmatprep.subr.mxu0 0.0
    %422 = vmatpush1.msra.mxu0 0.0
    %423 = vmatprep.subr.mxu0 0.0
    %424 = vmatpush1.msra.mxu0 0.0
    %425 = vmatprep.subr.mxu0 0.0
    %426 = vmatpush1.msra.mxu0 0.0
    %427 = vmatprep.subr.mxu0 0.0
    %428 = vmatpush1.msra.mxu0 0.0
    %429 = vmatprep.subr.mxu0 0.0
    %430 = vmatpush1.msra.mxu0 0.0
    %431 = vmatprep.subr.mxu0 0.0
    %432 = vmatpush1.msra.mxu0 0.0
    %433 = vmatprep.subr.mxu0 0.0
    %434 = vmatpush1.msra.mxu0 0.0
    %435 = vmatprep.subr.mxu0 0.0
    %436 = vmatpush1.msra.mxu0 0.0
    %437 = vmatprep.subr.mxu0 0.0
    %438 = vmatpush1.msra.mxu0 0.0
    %439 = vmatprep.subr.mxu0 0.0
    %440 = vmatpush1.msra.mxu0 0.0
    %441 = vmatprep.subr.mxu0 0.0
    %442 = vmatpush1.msra.mxu0 0.0
    %443 = vmatprep.subr.mxu0 0.0
    %444 = vmatpush1.msra.mxu0 0.0
    %445 = vmatprep.subr.mxu0 0.0
    %446 = vmatpush1.msra.mxu0 0.0
    %447 = vmatprep.subr.mxu0 0.0
    %448 = vmatpush1.msra.mxu0 0.0
    %449 = vmatprep.subr.mxu0 0.0
    %450 = vmatpush1.msra.mxu0 0.0
    %451 = vmatprep.subr.mxu0 0.0
    %452 = vmatpush1.msra.mxu0 0.0
    %453 = vmatprep.subr.mxu0 0.0
    %454 = vmatpush1.msra.mxu0 0.0
    %455 = vmatprep.subr.mxu0 0.0
    %456 = vmatpush1.msra.mxu0 0.0
    %457 = vmatprep.subr.mxu0 0.0
    %458 = vmatpush1.msra.mxu0 0.0
    %459 = vmatprep.subr.mxu0 0.0
    %460 = vmatpush1.msra.mxu0 0.0
    %461 = vmatprep.subr.mxu0 0.0
    %462 = vmatpush1.msra.mxu0 0.0
    %463 = vmatprep.subr.mxu0 0.0
    %464 = vmatpush1.msra.mxu0 0.0
    %465 = vmatprep.subr.mxu0 0.0
    %466 = vmatpush1.msra.mxu0 0.0
    %467 = vmatprep.subr.mxu0 0.0
    %468 = vmatpush1.msra.mxu0 0.0
    %469 = vmatprep.subr.mxu0 0.0
    %470 = vmatpush1.msra.mxu0 0.0
    %471 = vmatprep.subr.mxu0 0.0
    %472 = vmatpush1.msra.mxu0 0.0
    %473 = vmatprep.subr.mxu0 0.0
    %474 = vmatpush1.msra.mxu0 0.0
    %475 = vmatprep.subr.mxu0 0.0
    %476 = vmatpush1.msra.mxu0 0.0
    %477 = vmatprep.mubr.f32.mxu0 0.0
    %478 = vmatmul.mubr.f32.gmra.mrb[0].mxu0 %v198
    %v479 = vpop.f32.mrb[0].mxu0
    %v480 = vadd.f32 %v183, %v479
    %v481 = vpop.f32.mrb[0].mxu0
    %v482 = vadd.f32 %v187, %v481
    %483 = vdwg.mxu0
    %vm484 = vcmp.gt.f32.partialorder %v267, 0.0
    %vm485 = vcmp.gt.f32.partialorder %v269, 0.0
    %vm486 = vcmp.gt.f32.partialorder %v338, 0.0
    %vm487 = vcmp.gt.f32.partialorder %v340, 0.0
    %vm488 = vcmp.gt.f32.partialorder %v409, 0.0
    %vm489 = vcmp.gt.f32.partialorder %v411, 0.0
    %vm490 = vcmp.gt.f32.partialorder %v480, 0.0
    %vm491 = vcmp.gt.f32.partialorder %v482, 0.0
    %v492 = vmul.f32 %v267, 0.2
    %v493 = vmul.f32 %v269, 0.2
    %v494 = vmul.f32 %v338, 0.2
    %v495 = vmul.f32 %v340, 0.2
    %v496 = vmul.f32 %v409, 0.2
    %v497 = vmul.f32 %v411, 0.2
    %v498 = vmul.f32 %v480, 0.2
    %v499 = vmul.f32 %v482, 0.2
    %v500 = vsel %vm484, %v267, %v492
    %v501 = vsel %vm485, %v269, %v493
    %v502 = vsel %vm486, %v338, %v494
    %v503 = vsel %vm487, %v340, %v495
    %v504 = vsel %vm488, %v409, %v496
    %v505 = vsel %vm489, %v411, %v497
    %v506 = vsel %vm490, %v480, %v498
    %v507 = vsel %vm491, %v482, %v499
    %v508 = vlaneseq
    %v509 = vshrl.u32 %v508, 7
    %v510 = vstv %s104
    %v511 = vadd.s32 %v509, %v510
    %v512 = vlaneseq
    %v513 = vand.u32 %v512, 127
    %v514 = vadd.s32 %v513, 128
    %v515 = vadd.s32 %v513, 256
    %v516 = vadd.s32 %v513, 384
    %v517 = vadd.s32 %v513, 512
    %v518 = vadd.s32 %v513, 640
    %v519 = vadd.s32 %v513, 768
    %v520 = vadd.s32 %v513, 896
    %v521 = vmul.u32 %v511, 2654435761
    %v522 = vmul.u32 %v513, 2246822519
    %v523 = vmul.u32 %v514, 2246822519
    %v524 = vmul.u32 %v515, 2246822519
    %v525 = vmul.u32 %v516, 2246822519
    %v526 = vmul.u32 %v517, 2246822519
    %v527 = vmul.u32 %v518, 2246822519
    %v528 = vmul.u32 %v519, 2246822519
    %v529 = vmul.u32 %v520, 2246822519
    %v530 = vadd.s32 %v521, %v522
    %v531 = vadd.s32 %v521, %v523
    %v532 = vadd.s32 %v521, %v524
    %v533 = vadd.s32 %v521, %v525
    %v534 = vadd.s32 %v521, %v526
    %v535 = vadd.s32 %v521, %v527
    %v536 = vadd.s32 %v521, %v528
    %v537 = vadd.s32 %v521, %v529
    %s538 = sadd.s32 %s103, 3266489917
    %v539 = vstv %s538
    %v540 = vxor.u32 %v530, %v539
    %v541 = vxor.u32 %v531, %v539
    %v542 = vxor.u32 %v532, %v539
    %v543 = vxor.u32 %v533, %v539
    %v544 = vxor.u32 %v534, %v539
    %v545 = vxor.u32 %v535, %v539
    %v546 = vxor.u32 %v536, %v539
    %v547 = vxor.u32 %v537, %v539
    %v548 = vshrl.u32 %v540, 16
    %v549 = vshrl.u32 %v541, 16
    %v550 = vshrl.u32 %v542, 16
    %v551 = vshrl.u32 %v543, 16
    %v552 = vshrl.u32 %v544, 16
    %v553 = vshrl.u32 %v545, 16
    %v554 = vshrl.u32 %v546, 16
    %v555 = vshrl.u32 %v547, 16
    %v556 = vxor.u32 %v540, %v548
    %v557 = vxor.u32 %v541, %v549
    %v558 = vxor.u32 %v542, %v550
    %v559 = vxor.u32 %v543, %v551
    %v560 = vxor.u32 %v544, %v552
    %v561 = vxor.u32 %v545, %v553
    %v562 = vxor.u32 %v546, %v554
    %v563 = vxor.u32 %v547, %v555
    %v564 = vmul.u32 %v556, 2146121005
    %v565 = vmul.u32 %v557, 2146121005
    %v566 = vmul.u32 %v558, 2146121005
    %v567 = vmul.u32 %v559, 2146121005
    %v568 = vmul.u32 %v560, 2146121005
    %v569 = vmul.u32 %v561, 2146121005
    %v570 = vmul.u32 %v562, 2146121005
    %v571 = vmul.u32 %v563, 2146121005
    %v572 = vshrl.u32 %v564, 15
    %v573 = vshrl.u32 %v565, 15
    %v574 = vshrl.u32 %v566, 15
    %v575 = vshrl.u32 %v567, 15
    %v576 = vshrl.u32 %v568, 15
    %v577 = vshrl.u32 %v569, 15
    %v578 = vshrl.u32 %v570, 15
    %v579 = vshrl.u32 %v571, 15
    %v580 = vxor.u32 %v564, %v572
    %v581 = vxor.u32 %v565, %v573
    %v582 = vxor.u32 %v566, %v574
    %v583 = vxor.u32 %v567, %v575
    %v584 = vxor.u32 %v568, %v576
    %v585 = vxor.u32 %v569, %v577
    %v586 = vxor.u32 %v570, %v578
    %v587 = vxor.u32 %v571, %v579
    %v588 = vmul.u32 %v580, 2221713035
    %v589 = vmul.u32 %v581, 2221713035
    %v590 = vmul.u32 %v582, 2221713035
    %v591 = vmul.u32 %v583, 2221713035
    %v592 = vmul.u32 %v584, 2221713035
    %v593 = vmul.u32 %v585, 2221713035
    %v594 = vmul.u32 %v586, 2221713035
    %v595 = vmul.u32 %v587, 2221713035
    %v596 = vshrl.u32 %v588, 16
    %v597 = vshrl.u32 %v589, 16
    %v598 = vshrl.u32 %v590, 16
    %v599 = vshrl.u32 %v591, 16
    %v600 = vshrl.u32 %v592, 16
    %v601 = vshrl.u32 %v593, 16
    %v602 = vshrl.u32 %v594, 16
    %v603 = vshrl.u32 %v595, 16
    %v604 = vxor.u32 %v588, %v596
    %v605 = vxor.u32 %v589, %v597
    %v606 = vxor.u32 %v590, %v598
    %v607 = vxor.u32 %v591, %v599
    %v608 = vxor.u32 %v592, %v600
    %v609 = vxor.u32 %v593, %v601
    %v610 = vxor.u32 %v594, %v602
    %v611 = vxor.u32 %v595, %v603
    %vm612 = vcmp.ge.u32.totalorder %v604, 1288490188
    %vm613 = vcmp.ge.u32.totalorder %v605, 1288490188
    %vm614 = vcmp.ge.u32.totalorder %v606, 1288490188
    %vm615 = vcmp.ge.u32.totalorder %v607, 1288490188
    %vm616 = vcmp.ge.u32.totalorder %v608, 1288490188
    %vm617 = vcmp.ge.u32.totalorder %v609, 1288490188
    %vm618 = vcmp.ge.u32.totalorder %v610, 1288490188
    %vm619 = vcmp.ge.u32.totalorder %v611, 1288490188
    %v620 = vmul.f32 %v500, 1.4285715
    %v621 = vmul.f32 %v501, 1.4285715
    %v622 = vmul.f32 %v502, 1.4285715
    %v623 = vmul.f32 %v503, 1.4285715
    %v624 = vmul.f32 %v504, 1.4285715
    %v625 = vmul.f32 %v505, 1.4285715
    %v626 = vmul.f32 %v506, 1.4285715
    %v627 = vmul.f32 %v507, 1.4285715
    %v628 = vsel %vm612, %v620, 0.0
    %v629 = vsel %vm613, %v621, 0.0
    %v630 = vsel %vm614, %v622, 0.0
    %v631 = vsel %vm615, %v623, 0.0
    %v632 = vsel %vm616, %v624, 0.0
    %v633 = vsel %vm617, %v625, 0.0
    %v634 = vsel %vm618, %v626, 0.0
    %v635 = vsel %vm619, %v627, 0.0
    %v636 = vld [vmem:[#allocation8] sm:$0xff]
    %v637 = vld [vmem:[#allocation8 + $0x8] sm:$0xff]
    %v638 = vld [vmem:[#allocation8 + $0x10] sm:$0xff]
    %v639 = vld [vmem:[#allocation8 + $0x18] sm:$0xff]
    %v640 = vld [vmem:[#allocation8 + $0x20] sm:$0xff]
    %v641 = vld [vmem:[#allocation8 + $0x28] sm:$0xff]
    %v642 = vld [vmem:[#allocation8 + $0x30] sm:$0xff]
    %v643 = vld [vmem:[#allocation8 + $0x38] sm:$0xff]
    %v644 = vld [vmem:[#allocation8 + $0x40] sm:$0xff]
    %v645 = vld [vmem:[#allocation8 + $0x48] sm:$0xff]
    %v646 = vld [vmem:[#allocation8 + $0x50] sm:$0xff]
    %v647 = vld [vmem:[#allocation8 + $0x58] sm:$0xff]
    %v648 = vld [vmem:[#allocation8 + $0x60] sm:$0xff]
    %v649 = vld [vmem:[#allocation8 + $0x68] sm:$0xff]
    %v650 = vld [vmem:[#allocation8 + $0x70] sm:$0xff]
    %v651 = vld [vmem:[#allocation8 + $0x78] sm:$0xff]
    %v652 = vld [vmem:[#allocation8 + $0x80] sm:$0xff]
    %v653 = vld [vmem:[#allocation8 + $0x88] sm:$0xff]
    %v654 = vld [vmem:[#allocation8 + $0x90] sm:$0xff]
    %v655 = vld [vmem:[#allocation8 + $0x98] sm:$0xff]
    %v656 = vld [vmem:[#allocation8 + $0xa0] sm:$0xff]
    %v657 = vld [vmem:[#allocation8 + $0xa8] sm:$0xff]
    %v658 = vld [vmem:[#allocation8 + $0xb0] sm:$0xff]
    %v659 = vld [vmem:[#allocation8 + $0xb8] sm:$0xff]
    %v660 = vld [vmem:[#allocation8 + $0xc0] sm:$0xff]
    %v661 = vld [vmem:[#allocation8 + $0xc8] sm:$0xff]
    %v662 = vld [vmem:[#allocation8 + $0xd0] sm:$0xff]
    %v663 = vld [vmem:[#allocation8 + $0xd8] sm:$0xff]
    %v664 = vld [vmem:[#allocation8 + $0xe0] sm:$0xff]
    %v665 = vld [vmem:[#allocation8 + $0xe8] sm:$0xff]
    %v666 = vld [vmem:[#allocation8 + $0xf0] sm:$0xff]
    %v667 = vld [vmem:[#allocation8 + $0xf8] sm:$0xff]
    %v668 = vld [vmem:[#allocation8 + $0x100] sm:$0xff]
    %v669 = vld [vmem:[#allocation8 + $0x108] sm:$0xff]
    %v670 = vld [vmem:[#allocation8 + $0x110] sm:$0xff]
    %v671 = vld [vmem:[#allocation8 + $0x118] sm:$0xff]
    %v672 = vld [vmem:[#allocation8 + $0x120] sm:$0xff]
    %v673 = vld [vmem:[#allocation8 + $0x128] sm:$0xff]
    %v674 = vld [vmem:[#allocation8 + $0x130] sm:$0xff]
    %v675 = vld [vmem:[#allocation8 + $0x138] sm:$0xff]
    %v676 = vld [vmem:[#allocation8 + $0x140] sm:$0xff]
    %v677 = vld [vmem:[#allocation8 + $0x148] sm:$0xff]
    %v678 = vld [vmem:[#allocation8 + $0x150] sm:$0xff]
    %v679 = vld [vmem:[#allocation8 + $0x158] sm:$0xff]
    %v680 = vld [vmem:[#allocation8 + $0x160] sm:$0xff]
    %v681 = vld [vmem:[#allocation8 + $0x168] sm:$0xff]
    %v682 = vld [vmem:[#allocation8 + $0x170] sm:$0xff]
    %v683 = vld [vmem:[#allocation8 + $0x178] sm:$0xff]
    %v684 = vld [vmem:[#allocation8 + $0x180] sm:$0xff]
    %v685 = vld [vmem:[#allocation8 + $0x188] sm:$0xff]
    %v686 = vld [vmem:[#allocation8 + $0x190] sm:$0xff]
    %v687 = vld [vmem:[#allocation8 + $0x198] sm:$0xff]
    %v688 = vld [vmem:[#allocation8 + $0x1a0] sm:$0xff]
    %v689 = vld [vmem:[#allocation8 + $0x1a8] sm:$0xff]
    %v690 = vld [vmem:[#allocation8 + $0x1b0] sm:$0xff]
    %v691 = vld [vmem:[#allocation8 + $0x1b8] sm:$0xff]
    %v692 = vld [vmem:[#allocation8 + $0x1c0] sm:$0xff]
    %v693 = vld [vmem:[#allocation8 + $0x1c8] sm:$0xff]
    %v694 = vld [vmem:[#allocation8 + $0x1d0] sm:$0xff]
    %v695 = vld [vmem:[#allocation8 + $0x1d8] sm:$0xff]
    %v696 = vld [vmem:[#allocation8 + $0x1e0] sm:$0xff]
    %v697 = vld [vmem:[#allocation8 + $0x1e8] sm:$0xff]
    %v698 = vld [vmem:[#allocation8 + $0x1f0] sm:$0xff]
    %v699 = vld [vmem:[#allocation8 + $0x1f8] sm:$0xff]
    %v700 = vld [vmem:[#allocation8 + $0x200] sm:$0xff]
    %v701 = vld [vmem:[#allocation8 + $0x208] sm:$0xff]
    %v702 = vld [vmem:[#allocation8 + $0x210] sm:$0xff]
    %v703 = vld [vmem:[#allocation8 + $0x218] sm:$0xff]
    %v704 = vld [vmem:[#allocation8 + $0x220] sm:$0xff]
    %v705 = vld [vmem:[#allocation8 + $0x228] sm:$0xff]
    %v706 = vld [vmem:[#allocation8 + $0x230] sm:$0xff]
    %v707 = vld [vmem:[#allocation8 + $0x238] sm:$0xff]
    %v708 = vld [vmem:[#allocation8 + $0x240] sm:$0xff]
    %v709 = vld [vmem:[#allocation8 + $0x248] sm:$0xff]
    %v710 = vld [vmem:[#allocation8 + $0x250] sm:$0xff]
    %v711 = vld [vmem:[#allocation8 + $0x258] sm:$0xff]
    %v712 = vld [vmem:[#allocation8 + $0x260] sm:$0xff]
    %v713 = vld [vmem:[#allocation8 + $0x268] sm:$0xff]
    %v714 = vld [vmem:[#allocation8 + $0x270] sm:$0xff]
    %v715 = vld [vmem:[#allocation8 + $0x278] sm:$0xff]
    %v716 = vld [vmem:[#allocation8 + $0x280] sm:$0xff]
    %v717 = vld [vmem:[#allocation8 + $0x288] sm:$0xff]
    %v718 = vld [vmem:[#allocation8 + $0x290] sm:$0xff]
    %v719 = vld [vmem:[#allocation8 + $0x298] sm:$0xff]
    %v720 = vld [vmem:[#allocation8 + $0x2a0] sm:$0xff]
    %v721 = vld [vmem:[#allocation8 + $0x2a8] sm:$0xff]
    %v722 = vld [vmem:[#allocation8 + $0x2b0] sm:$0xff]
    %v723 = vld [vmem:[#allocation8 + $0x2b8] sm:$0xff]
    %v724 = vld [vmem:[#allocation8 + $0x2c0] sm:$0xff]
    %v725 = vld [vmem:[#allocation8 + $0x2c8] sm:$0xff]
    %v726 = vld [vmem:[#allocation8 + $0x2d0] sm:$0xff]
    %v727 = vld [vmem:[#allocation8 + $0x2d8] sm:$0xff]
    %v728 = vld [vmem:[#allocation8 + $0x2e0] sm:$0xff]
    %v729 = vld [vmem:[#allocation8 + $0x2e8] sm:$0xff]
    %v730 = vld [vmem:[#allocation8 + $0x2f0] sm:$0xff]
    %v731 = vld [vmem:[#allocation8 + $0x2f8] sm:$0xff]
    %v732 = vld [vmem:[#allocation8 + $0x300] sm:$0xff]
    %v733 = vld [vmem:[#allocation8 + $0x308] sm:$0xff]
    %v734 = vld [vmem:[#allocation8 + $0x310] sm:$0xff]
    %v735 = vld [vmem:[#allocation8 + $0x318] sm:$0xff]
    %v736 = vld [vmem:[#allocation8 + $0x320] sm:$0xff]
    %v737 = vld [vmem:[#allocation8 + $0x328] sm:$0xff]
    %v738 = vld [vmem:[#allocation8 + $0x330] sm:$0xff]
    %v739 = vld [vmem:[#allocation8 + $0x338] sm:$0xff]
    %v740 = vld [vmem:[#allocation8 + $0x340] sm:$0xff]
    %v741 = vld [vmem:[#allocation8 + $0x348] sm:$0xff]
    %v742 = vld [vmem:[#allocation8 + $0x350] sm:$0xff]
    %v743 = vld [vmem:[#allocation8 + $0x358] sm:$0xff]
    %v744 = vld [vmem:[#allocation8 + $0x360] sm:$0xff]
    %v745 = vld [vmem:[#allocation8 + $0x368] sm:$0xff]
    %v746 = vld [vmem:[#allocation8 + $0x370] sm:$0xff]
    %v747 = vld [vmem:[#allocation8 + $0x378] sm:$0xff]
    %v748 = vld [vmem:[#allocation8 + $0x380] sm:$0xff]
    %v749 = vld [vmem:[#allocation8 + $0x388] sm:$0xff]
    %v750 = vld [vmem:[#allocation8 + $0x390] sm:$0xff]
    %v751 = vld [vmem:[#allocation8 + $0x398] sm:$0xff]
    %v752 = vld [vmem:[#allocation8 + $0x3a0] sm:$0xff]
    %v753 = vld [vmem:[#allocation8 + $0x3a8] sm:$0xff]
    %v754 = vld [vmem:[#allocation8 + $0x3b0] sm:$0xff]
    %v755 = vld [vmem:[#allocation8 + $0x3b8] sm:$0xff]
    %v756 = vld [vmem:[#allocation8 + $0x3c0] sm:$0xff]
    %v757 = vld [vmem:[#allocation8 + $0x3c8] sm:$0xff]
    %v758 = vld [vmem:[#allocation8 + $0x3d0] sm:$0xff]
    %v759 = vld [vmem:[#allocation8 + $0x3d8] sm:$0xff]
    %v760 = vld [vmem:[#allocation8 + $0x3e0] sm:$0xff]
    %v761 = vld [vmem:[#allocation8 + $0x3e8] sm:$0xff]
    %v762 = vld [vmem:[#allocation8 + $0x3f0] sm:$0xff]
    %v763 = vld [vmem:[#allocation8 + $0x3f8] sm:$0xff]
    %v764 = vld [vmem:[#allocation8 + $0x400] sm:$0xff]
    %v765 = vld [vmem:[#allocation8 + $0x408] sm:$0xff]
    %v766 = vld [vmem:[#allocation8 + $0x410] sm:$0xff]
    %v767 = vld [vmem:[#allocation8 + $0x418] sm:$0xff]
    %v768 = vld [vmem:[#allocation8 + $0x420] sm:$0xff]
    %v769 = vld [vmem:[#allocation8 + $0x428] sm:$0xff]
    %v770 = vld [vmem:[#allocation8 + $0x430] sm:$0xff]
    %v771 = vld [vmem:[#allocation8 + $0x438] sm:$0xff]
    %v772 = vld [vmem:[#allocation8 + $0x440] sm:$0xff]
    %v773 = vld [vmem:[#allocation8 + $0x448] sm:$0xff]
    %v774 = vld [vmem:[#allocation8 + $0x450] sm:$0xff]
    %v775 = vld [vmem:[#allocation8 + $0x458] sm:$0xff]
    %v776 = vld [vmem:[#allocation8 + $0x460] sm:$0xff]
    %v777 = vld [vmem:[#allocation8 + $0x468] sm:$0xff]
    %v778 = vld [vmem:[#allocation8 + $0x470] sm:$0xff]
    %v779 = vld [vmem:[#allocation8 + $0x478] sm:$0xff]
    %v780 = vld [vmem:[#allocation8 + $0x480] sm:$0xff]
    %v781 = vld [vmem:[#allocation8 + $0x488] sm:$0xff]
    %v782 = vld [vmem:[#allocation8 + $0x490] sm:$0xff]
    %v783 = vld [vmem:[#allocation8 + $0x498] sm:$0xff]
    %v784 = vld [vmem:[#allocation8 + $0x4a0] sm:$0xff]
    %v785 = vld [vmem:[#allocation8 + $0x4a8] sm:$0xff]
    %v786 = vld [vmem:[#allocation8 + $0x4b0] sm:$0xff]
    %v787 = vld [vmem:[#allocation8 + $0x4b8] sm:$0xff]
    %v788 = vld [vmem:[#allocation8 + $0x4c0] sm:$0xff]
    %v789 = vld [vmem:[#allocation8 + $0x4c8] sm:$0xff]
    %v790 = vld [vmem:[#allocation8 + $0x4d0] sm:$0xff]
    %v791 = vld [vmem:[#allocation8 + $0x4d8] sm:$0xff]
    %v792 = vld [vmem:[#allocation8 + $0x4e0] sm:$0xff]
    %v793 = vld [vmem:[#allocation8 + $0x4e8] sm:$0xff]
    %v794 = vld [vmem:[#allocation8 + $0x4f0] sm:$0xff]
    %v795 = vld [vmem:[#allocation8 + $0x4f8] sm:$0xff]
    %v796 = vld [vmem:[#allocation8 + $0x500] sm:$0xff]
    %v797 = vld [vmem:[#allocation8 + $0x508] sm:$0xff]
    %v798 = vld [vmem:[#allocation8 + $0x510] sm:$0xff]
    %v799 = vld [vmem:[#allocation8 + $0x518] sm:$0xff]
    %v800 = vld [vmem:[#allocation8 + $0x520] sm:$0xff]
    %v801 = vld [vmem:[#allocation8 + $0x528] sm:$0xff]
    %v802 = vld [vmem:[#allocation8 + $0x530] sm:$0xff]
    %v803 = vld [vmem:[#allocation8 + $0x538] sm:$0xff]
    %v804 = vld [vmem:[#allocation8 + $0x540] sm:$0xff]
    %v805 = vld [vmem:[#allocation8 + $0x548] sm:$0xff]
    %v806 = vld [vmem:[#allocation8 + $0x550] sm:$0xff]
    %v807 = vld [vmem:[#allocation8 + $0x558] sm:$0xff]
    %v808 = vld [vmem:[#allocation8 + $0x560] sm:$0xff]
    %v809 = vld [vmem:[#allocation8 + $0x568] sm:$0xff]
    %v810 = vld [vmem:[#allocation8 + $0x570] sm:$0xff]
    %v811 = vld [vmem:[#allocation8 + $0x578] sm:$0xff]
    %v812 = vld [vmem:[#allocation8 + $0x580] sm:$0xff]
    %v813 = vld [vmem:[#allocation8 + $0x588] sm:$0xff]
    %v814 = vld [vmem:[#allocation8 + $0x590] sm:$0xff]
    %v815 = vld [vmem:[#allocation8 + $0x598] sm:$0xff]
    %v816 = vld [vmem:[#allocation8 + $0x5a0] sm:$0xff]
    %v817 = vld [vmem:[#allocation8 + $0x5a8] sm:$0xff]
    %v818 = vld [vmem:[#allocation8 + $0x5b0] sm:$0xff]
    %v819 = vld [vmem:[#allocation8 + $0x5b8] sm:$0xff]
    %v820 = vld [vmem:[#allocation8 + $0x5c0] sm:$0xff]
    %v821 = vld [vmem:[#allocation8 + $0x5c8] sm:$0xff]
    %v822 = vld [vmem:[#allocation8 + $0x5d0] sm:$0xff]
    %v823 = vld [vmem:[#allocation8 + $0x5d8] sm:$0xff]
    %v824 = vld [vmem:[#allocation8 + $0x5e0] sm:$0xff]
    %v825 = vld [vmem:[#allocation8 + $0x5e8] sm:$0xff]
    %v826 = vld [vmem:[#allocation8 + $0x5f0] sm:$0xff]
    %v827 = vld [vmem:[#allocation8 + $0x5f8] sm:$0xff]
    %v828 = vld [vmem:[#allocation8 + $0x600] sm:$0xff]
    %v829 = vld [vmem:[#allocation8 + $0x608] sm:$0xff]
    %v830 = vld [vmem:[#allocation8 + $0x610] sm:$0xff]
    %v831 = vld [vmem:[#allocation8 + $0x618] sm:$0xff]
    %v832 = vld [vmem:[#allocation8 + $0x620] sm:$0xff]
    %v833 = vld [vmem:[#allocation8 + $0x628] sm:$0xff]
    %v834 = vld [vmem:[#allocation8 + $0x630] sm:$0xff]
    %v835 = vld [vmem:[#allocation8 + $0x638] sm:$0xff]
    %v836 = vld [vmem:[#allocation8 + $0x640] sm:$0xff]
    %v837 = vld [vmem:[#allocation8 + $0x648] sm:$0xff]
    %v838 = vld [vmem:[#allocation8 + $0x650] sm:$0xff]
    %v839 = vld [vmem:[#allocation8 + $0x658] sm:$0xff]
    %v840 = vld [vmem:[#allocation8 + $0x660] sm:$0xff]
    %v841 = vld [vmem:[#allocation8 + $0x668] sm:$0xff]
    %v842 = vld [vmem:[#allocation8 + $0x670] sm:$0xff]
    %v843 = vld [vmem:[#allocation8 + $0x678] sm:$0xff]
    %v844 = vld [vmem:[#allocation8 + $0x680] sm:$0xff]
    %v845 = vld [vmem:[#allocation8 + $0x688] sm:$0xff]
    %v846 = vld [vmem:[#allocation8 + $0x690] sm:$0xff]
    %v847 = vld [vmem:[#allocation8 + $0x698] sm:$0xff]
    %v848 = vld [vmem:[#allocation8 + $0x6a0] sm:$0xff]
    %v849 = vld [vmem:[#allocation8 + $0x6a8] sm:$0xff]
    %v850 = vld [vmem:[#allocation8 + $0x6b0] sm:$0xff]
    %v851 = vld [vmem:[#allocation8 + $0x6b8] sm:$0xff]
    %v852 = vld [vmem:[#allocation8 + $0x6c0] sm:$0xff]
    %v853 = vld [vmem:[#allocation8 + $0x6c8] sm:$0xff]
    %v854 = vld [vmem:[#allocation8 + $0x6d0] sm:$0xff]
    %v855 = vld [vmem:[#allocation8 + $0x6d8] sm:$0xff]
    %v856 = vld [vmem:[#allocation8 + $0x6e0] sm:$0xff]
    %v857 = vld [vmem:[#allocation8 + $0x6e8] sm:$0xff]
    %v858 = vld [vmem:[#allocation8 + $0x6f0] sm:$0xff]
    %v859 = vld [vmem:[#allocation8 + $0x6f8] sm:$0xff]
    %v860 = vld [vmem:[#allocation8 + $0x700] sm:$0xff]
    %v861 = vld [vmem:[#allocation8 + $0x708] sm:$0xff]
    %v862 = vld [vmem:[#allocation8 + $0x710] sm:$0xff]
    %v863 = vld [vmem:[#allocation8 + $0x718] sm:$0xff]
    %v864 = vld [vmem:[#allocation8 + $0x720] sm:$0xff]
    %v865 = vld [vmem:[#allocation8 + $0x728] sm:$0xff]
    %v866 = vld [vmem:[#allocation8 + $0x730] sm:$0xff]
    %v867 = vld [vmem:[#allocation8 + $0x738] sm:$0xff]
    %v868 = vld [vmem:[#allocation8 + $0x740] sm:$0xff]
    %v869 = vld [vmem:[#allocation8 + $0x748] sm:$0xff]
    %v870 = vld [vmem:[#allocation8 + $0x750] sm:$0xff]
    %v871 = vld [vmem:[#allocation8 + $0x758] sm:$0xff]
    %v872 = vld [vmem:[#allocation8 + $0x760] sm:$0xff]
    %v873 = vld [vmem:[#allocation8 + $0x768] sm:$0xff]
    %v874 = vld [vmem:[#allocation8 + $0x770] sm:$0xff]
    %v875 = vld [vmem:[#allocation8 + $0x778] sm:$0xff]
    %v876 = vld [vmem:[#allocation8 + $0x780] sm:$0xff]
    %v877 = vld [vmem:[#allocation8 + $0x788] sm:$0xff]
    %v878 = vld [vmem:[#allocation8 + $0x790] sm:$0xff]
    %v879 = vld [vmem:[#allocation8 + $0x798] sm:$0xff]
    %v880 = vld [vmem:[#allocation8 + $0x7a0] sm:$0xff]
    %v881 = vld [vmem:[#allocation8 + $0x7a8] sm:$0xff]
    %v882 = vld [vmem:[#allocation8 + $0x7b0] sm:$0xff]
    %v883 = vld [vmem:[#allocation8 + $0x7b8] sm:$0xff]
    %v884 = vld [vmem:[#allocation8 + $0x7c0] sm:$0xff]
    %v885 = vld [vmem:[#allocation8 + $0x7c8] sm:$0xff]
    %v886 = vld [vmem:[#allocation8 + $0x7d0] sm:$0xff]
    %v887 = vld [vmem:[#allocation8 + $0x7d8] sm:$0xff]
    %v888 = vld [vmem:[#allocation8 + $0x7e0] sm:$0xff]
    %v889 = vld [vmem:[#allocation8 + $0x7e8] sm:$0xff]
    %v890 = vld [vmem:[#allocation8 + $0x7f0] sm:$0xff]
    %v891 = vld [vmem:[#allocation8 + $0x7f8] sm:$0xff]
    %v892 = vunpack.c.l.bf16 %v636
    %v893 = vunpack.c.h.bf16 %v636
    %v894 = vunpack.c.l.bf16 %v637
    %v895 = vunpack.c.h.bf16 %v637
    %v896 = vunpack.c.l.bf16 %v638
    %v897 = vunpack.c.h.bf16 %v638
    %v898 = vunpack.c.l.bf16 %v639
    %v899 = vunpack.c.h.bf16 %v639
    %v900 = vunpack.c.l.bf16 %v640
    %v901 = vunpack.c.h.bf16 %v640
    %v902 = vunpack.c.l.bf16 %v641
    %v903 = vunpack.c.h.bf16 %v641
    %v904 = vunpack.c.l.bf16 %v642
    %v905 = vunpack.c.h.bf16 %v642
    %v906 = vunpack.c.l.bf16 %v643
    %v907 = vunpack.c.h.bf16 %v643
    %v908 = vunpack.c.l.bf16 %v644
    %v909 = vunpack.c.h.bf16 %v644
    %v910 = vunpack.c.l.bf16 %v645
    %v911 = vunpack.c.h.bf16 %v645
    %v912 = vunpack.c.l.bf16 %v646
    %v913 = vunpack.c.h.bf16 %v646
    %v914 = vunpack.c.l.bf16 %v647
    %v915 = vunpack.c.h.bf16 %v647
    %v916 = vunpack.c.l.bf16 %v648
    %v917 = vunpack.c.h.bf16 %v648
    %v918 = vunpack.c.l.bf16 %v649
    %v919 = vunpack.c.h.bf16 %v649
    %v920 = vunpack.c.l.bf16 %v650
    %v921 = vunpack.c.h.bf16 %v650
    %v922 = vunpack.c.l.bf16 %v651
    %v923 = vunpack.c.h.bf16 %v651
    %v924 = vunpack.c.l.bf16 %v652
    %v925 = vunpack.c.h.bf16 %v652
    %v926 = vunpack.c.l.bf16 %v653
    %v927 = vunpack.c.h.bf16 %v653
    %v928 = vunpack.c.l.bf16 %v654
    %v929 = vunpack.c.h.bf16 %v654
    %v930 = vunpack.c.l.bf16 %v655
    %v931 = vunpack.c.h.bf16 %v655
    %v932 = vunpack.c.l.bf16 %v656
    %v933 = vunpack.c.h.bf16 %v656
    %v934 = vunpack.c.l.bf16 %v657
    %v935 = vunpack.c.h.bf16 %v657
    %v936 = vunpack.c.l.bf16 %v658
    %v937 = vunpack.c.h.bf16 %v658
    %v938 = vunpack.c.l.bf16 %v659
    %v939 = vunpack.c.h.bf16 %v659
    %v940 = vunpack.c.l.bf16 %v660
    %v941 = vunpack.c.h.bf16 %v660
    %v942 = vunpack.c.l.bf16 %v661
    %v943 = vunpack.c.h.bf16 %v661
    %v944 = vunpack.c.l.bf16 %v662
    %v945 = vunpack.c.h.bf16 %v662
    %v946 = vunpack.c.l.bf16 %v663
    %v947 = vunpack.c.h.bf16 %v663
    %v948 = vunpack.c.l.bf16 %v664
    %v949 = vunpack.c.h.bf16 %v664
    %v950 = vunpack.c.l.bf16 %v665
    %v951 = vunpack.c.h.bf16 %v665
    %v952 = vunpack.c.l.bf16 %v666
    %v953 = vunpack.c.h.bf16 %v666
    %v954 = vunpack.c.l.bf16 %v667
    %v955 = vunpack.c.h.bf16 %v667
    %v956 = vunpack.c.l.bf16 %v668
    %v957 = vunpack.c.h.bf16 %v668
    %v958 = vunpack.c.l.bf16 %v669
    %v959 = vunpack.c.h.bf16 %v669
    %v960 = vunpack.c.l.bf16 %v670
    %v961 = vunpack.c.h.bf16 %v670
    %v962 = vunpack.c.l.bf16 %v671
    %v963 = vunpack.c.h.bf16 %v671
    %v964 = vunpack.c.l.bf16 %v672
    %v965 = vunpack.c.h.bf16 %v672
    %v966 = vunpack.c.l.bf16 %v673
    %v967 = vunpack.c.h.bf16 %v673
    %v968 = vunpack.c.l.bf16 %v674
    %v969 = vunpack.c.h.bf16 %v674
    %v970 = vunpack.c.l.bf16 %v675
    %v971 = vunpack.c.h.bf16 %v675
    %v972 = vunpack.c.l.bf16 %v676
    %v973 = vunpack.c.h.bf16 %v676
    %v974 = vunpack.c.l.bf16 %v677
    %v975 = vunpack.c.h.bf16 %v677
    %v976 = vunpack.c.l.bf16 %v678
    %v977 = vunpack.c.h.bf16 %v678
    %v978 = vunpack.c.l.bf16 %v679
    %v979 = vunpack.c.h.bf16 %v679
    %v980 = vunpack.c.l.bf16 %v680
    %v981 = vunpack.c.h.bf16 %v680
    %v982 = vunpack.c.l.bf16 %v681
    %v983 = vunpack.c.h.bf16 %v681
    %v984 = vunpack.c.l.bf16 %v682
    %v985 = vunpack.c.h.bf16 %v682
    %v986 = vunpack.c.l.bf16 %v683
    %v987 = vunpack.c.h.bf16 %v683
    %v988 = vunpack.c.l.bf16 %v684
    %v989 = vunpack.c.h.bf16 %v684
    %v990 = vunpack.c.l.bf16 %v685
    %v991 = vunpack.c.h.bf16 %v685
    %v992 = vunpack.c.l.bf16 %v686
    %v993 = vunpack.c.h.bf16 %v686
    %v994 = vunpack.c.l.bf16 %v687
    %v995 = vunpack.c.h.bf16 %v687
    %v996 = vunpack.c.l.bf16 %v688
    %v997 = vunpack.c.h.bf16 %v688
    %v998 = vunpack.c.l.bf16 %v689
    %v999 = vunpack.c.h.bf16 %v689
    %v1000 = vunpack.c.l.bf16 %v690
    %v1001 = vunpack.c.h.bf16 %v690
    %v1002 = vunpack.c.l.bf16 %v691
    %v1003 = vunpack.c.h.bf16 %v691
    %v1004 = vunpack.c.l.bf16 %v692
    %v1005 = vunpack.c.h.bf16 %v692
    %v1006 = vunpack.c.l.bf16 %v693
    %v1007 = vunpack.c.h.bf16 %v693
    %v1008 = vunpack.c.l.bf16 %v694
    %v1009 = vunpack.c.h.bf16 %v694
    %v1010 = vunpack.c.l.bf16 %v695
    %v1011 = vunpack.c.h.bf16 %v695
    %v1012 = vunpack.c.l.bf16 %v696
    %v1013 = vunpack.c.h.bf16 %v696
    %v1014 = vunpack.c.l.bf16 %v697
    %v1015 = vunpack.c.h.bf16 %v697
    %v1016 = vunpack.c.l.bf16 %v698
    %v1017 = vunpack.c.h.bf16 %v698
    %v1018 = vunpack.c.l.bf16 %v699
    %v1019 = vunpack.c.h.bf16 %v699
    %v1020 = vunpack.c.l.bf16 %v700
    %v1021 = vunpack.c.h.bf16 %v700
    %v1022 = vunpack.c.l.bf16 %v701
    %v1023 = vunpack.c.h.bf16 %v701
    %v1024 = vunpack.c.l.bf16 %v702
    %v1025 = vunpack.c.h.bf16 %v702
    %v1026 = vunpack.c.l.bf16 %v703
    %v1027 = vunpack.c.h.bf16 %v703
    %v1028 = vunpack.c.l.bf16 %v704
    %v1029 = vunpack.c.h.bf16 %v704
    %v1030 = vunpack.c.l.bf16 %v705
    %v1031 = vunpack.c.h.bf16 %v705
    %v1032 = vunpack.c.l.bf16 %v706
    %v1033 = vunpack.c.h.bf16 %v706
    %v1034 = vunpack.c.l.bf16 %v707
    %v1035 = vunpack.c.h.bf16 %v707
    %v1036 = vunpack.c.l.bf16 %v708
    %v1037 = vunpack.c.h.bf16 %v708
    %v1038 = vunpack.c.l.bf16 %v709
    %v1039 = vunpack.c.h.bf16 %v709
    %v1040 = vunpack.c.l.bf16 %v710
    %v1041 = vunpack.c.h.bf16 %v710
    %v1042 = vunpack.c.l.bf16 %v711
    %v1043 = vunpack.c.h.bf16 %v711
    %v1044 = vunpack.c.l.bf16 %v712
    %v1045 = vunpack.c.h.bf16 %v712
    %v1046 = vunpack.c.l.bf16 %v713
    %v1047 = vunpack.c.h.bf16 %v713
    %v1048 = vunpack.c.l.bf16 %v714
    %v1049 = vunpack.c.h.bf16 %v714
    %v1050 = vunpack.c.l.bf16 %v715
    %v1051 = vunpack.c.h.bf16 %v715
    %v1052 = vunpack.c.l.bf16 %v716
    %v1053 = vunpack.c.h.bf16 %v716
    %v1054 = vunpack.c.l.bf16 %v717
    %v1055 = vunpack.c.h.bf16 %v717
    %v1056 = vunpack.c.l.bf16 %v718
    %v1057 = vunpack.c.h.bf16 %v718
    %v1058 = vunpack.c.l.bf16 %v719
    %v1059 = vunpack.c.h.bf16 %v719
    %v1060 = vunpack.c.l.bf16 %v720
    %v1061 = vunpack.c.h.bf16 %v720
    %v1062 = vunpack.c.l.bf16 %v721
    %v1063 = vunpack.c.h.bf16 %v721
    %v1064 = vunpack.c.l.bf16 %v722
    %v1065 = vunpack.c.h.bf16 %v722
    %v1066 = vunpack.c.l.bf16 %v723
    %v1067 = vunpack.c.h.bf16 %v723
    %v1068 = vunpack.c.l.bf16 %v724
    %v1069 = vunpack.c.h.bf16 %v724
    %v1070 = vunpack.c.l.bf16 %v725
    %v1071 = vunpack.c.h.bf16 %v725
    %v1072 = vunpack.c.l.bf16 %v726
    %v1073 = vunpack.c.h.bf16 %v726
    %v1074 = vunpack.c.l.bf16 %v727
    %v1075 = vunpack.c.h.bf16 %v727
    %v1076 = vunpack.c.l.bf16 %v728
    %v1077 = vunpack.c.h.bf16 %v728
    %v1078 = vunpack.c.l.bf16 %v729
    %v1079 = vunpack.c.h.bf16 %v729
    %v1080 = vunpack.c.l.bf16 %v730
    %v1081 = vunpack.c.h.bf16 %v730
    %v1082 = vunpack.c.l.bf16 %v731
    %v1083 = vunpack.c.h.bf16 %v731
    %v1084 = vunpack.c.l.bf16 %v732
    %v1085 = vunpack.c.h.bf16 %v732
    %v1086 = vunpack.c.l.bf16 %v733
    %v1087 = vunpack.c.h.bf16 %v733
    %v1088 = vunpack.c.l.bf16 %v734
    %v1089 = vunpack.c.h.bf16 %v734
    %v1090 = vunpack.c.l.bf16 %v735
    %v1091 = vunpack.c.h.bf16 %v735
    %v1092 = vunpack.c.l.bf16 %v736
    %v1093 = vunpack.c.h.bf16 %v736
    %v1094 = vunpack.c.l.bf16 %v737
    %v1095 = vunpack.c.h.bf16 %v737
    %v1096 = vunpack.c.l.bf16 %v738
    %v1097 = vunpack.c.h.bf16 %v738
    %v1098 = vunpack.c.l.bf16 %v739
    %v1099 = vunpack.c.h.bf16 %v739
    %v1100 = vunpack.c.l.bf16 %v740
    %v1101 = vunpack.c.h.bf16 %v740
    %v1102 = vunpack.c.l.bf16 %v741
    %v1103 = vunpack.c.h.bf16 %v741
    %v1104 = vunpack.c.l.bf16 %v742
    %v1105 = vunpack.c.h.bf16 %v742
    %v1106 = vunpack.c.l.bf16 %v743
    %v1107 = vunpack.c.h.bf16 %v743
    %v1108 = vunpack.c.l.bf16 %v744
    %v1109 = vunpack.c.h.bf16 %v744
    %v1110 = vunpack.c.l.bf16 %v745
    %v1111 = vunpack.c.h.bf16 %v745
    %v1112 = vunpack.c.l.bf16 %v746
    %v1113 = vunpack.c.h.bf16 %v746
    %v1114 = vunpack.c.l.bf16 %v747
    %v1115 = vunpack.c.h.bf16 %v747
    %v1116 = vunpack.c.l.bf16 %v748
    %v1117 = vunpack.c.h.bf16 %v748
    %v1118 = vunpack.c.l.bf16 %v749
    %v1119 = vunpack.c.h.bf16 %v749
    %v1120 = vunpack.c.l.bf16 %v750
    %v1121 = vunpack.c.h.bf16 %v750
    %v1122 = vunpack.c.l.bf16 %v751
    %v1123 = vunpack.c.h.bf16 %v751
    %v1124 = vunpack.c.l.bf16 %v752
    %v1125 = vunpack.c.h.bf16 %v752
    %v1126 = vunpack.c.l.bf16 %v753
    %v1127 = vunpack.c.h.bf16 %v753
    %v1128 = vunpack.c.l.bf16 %v754
    %v1129 = vunpack.c.h.bf16 %v754
    %v1130 = vunpack.c.l.bf16 %v755
    %v1131 = vunpack.c.h.bf16 %v755
    %v1132 = vunpack.c.l.bf16 %v756
    %v1133 = vunpack.c.h.bf16 %v756
    %v1134 = vunpack.c.l.bf16 %v757
    %v1135 = vunpack.c.h.bf16 %v757
    %v1136 = vunpack.c.l.bf16 %v758
    %v1137 = vunpack.c.h.bf16 %v758
    %v1138 = vunpack.c.l.bf16 %v759
    %v1139 = vunpack.c.h.bf16 %v759
    %v1140 = vunpack.c.l.bf16 %v760
    %v1141 = vunpack.c.h.bf16 %v760
    %v1142 = vunpack.c.l.bf16 %v761
    %v1143 = vunpack.c.h.bf16 %v761
    %v1144 = vunpack.c.l.bf16 %v762
    %v1145 = vunpack.c.h.bf16 %v762
    %v1146 = vunpack.c.l.bf16 %v763
    %v1147 = vunpack.c.h.bf16 %v763
    %v1148 = vunpack.c.l.bf16 %v764
    %v1149 = vunpack.c.h.bf16 %v764
    %v1150 = vunpack.c.l.bf16 %v765
    %v1151 = vunpack.c.h.bf16 %v765
    %v1152 = vunpack.c.l.bf16 %v766
    %v1153 = vunpack.c.h.bf16 %v766
    %v1154 = vunpack.c.l.bf16 %v767
    %v1155 = vunpack.c.h.bf16 %v767
    %v1156 = vunpack.c.l.bf16 %v768
    %v1157 = vunpack.c.h.bf16 %v768
    %v1158 = vunpack.c.l.bf16 %v769
    %v1159 = vunpack.c.h.bf16 %v769
    %v1160 = vunpack.c.l.bf16 %v770
    %v1161 = vunpack.c.h.bf16 %v770
    %v1162 = vunpack.c.l.bf16 %v771
    %v1163 = vunpack.c.h.bf16 %v771
    %v1164 = vunpack.c.l.bf16 %v772
    %v1165 = vunpack.c.h.bf16 %v772
    %v1166 = vunpack.c.l.bf16 %v773
    %v1167 = vunpack.c.h.bf16 %v773
    %v1168 = vunpack.c.l.bf16 %v774
    %v1169 = vunpack.c.h.bf16 %v774
    %v1170 = vunpack.c.l.bf16 %v775
    %v1171 = vunpack.c.h.bf16 %v775
    %v1172 = vunpack.c.l.bf16 %v776
    %v1173 = vunpack.c.h.bf16 %v776
    %v1174 = vunpack.c.l.bf16 %v777
    %v1175 = vunpack.c.h.bf16 %v777
    %v1176 = vunpack.c.l.bf16 %v778
    %v1177 = vunpack.c.h.bf16 %v778
    %v1178 = vunpack.c.l.bf16 %v779
    %v1179 = vunpack.c.h.bf16 %v779
    %v1180 = vunpack.c.l.bf16 %v780
    %v1181 = vunpack.c.h.bf16 %v780
    %v1182 = vunpack.c.l.bf16 %v781
    %v1183 = vunpack.c.h.bf16 %v781
    %v1184 = vunpack.c.l.bf16 %v782
    %v1185 = vunpack.c.h.bf16 %v782
    %v1186 = vunpack.c.l.bf16 %v783
    %v1187 = vunpack.c.h.bf16 %v783
    %v1188 = vunpack.c.l.bf16 %v784
    %v1189 = vunpack.c.h.bf16 %v784
    %v1190 = vunpack.c.l.bf16 %v785
    %v1191 = vunpack.c.h.bf16 %v785
    %v1192 = vunpack.c.l.bf16 %v786
    %v1193 = vunpack.c.h.bf16 %v786
    %v1194 = vunpack.c.l.bf16 %v787
    %v1195 = vunpack.c.h.bf16 %v787
    %v1196 = vunpack.c.l.bf16 %v788
    %v1197 = vunpack.c.h.bf16 %v788
    %v1198 = vunpack.c.l.bf16 %v789
    %v1199 = vunpack.c.h.bf16 %v789
    %v1200 = vunpack.c.l.bf16 %v790
    %v1201 = vunpack.c.h.bf16 %v790
    %v1202 = vunpack.c.l.bf16 %v791
    %v1203 = vunpack.c.h.bf16 %v791
    %v1204 = vunpack.c.l.bf16 %v792
    %v1205 = vunpack.c.h.bf16 %v792
    %v1206 = vunpack.c.l.bf16 %v793
    %v1207 = vunpack.c.h.bf16 %v793
    %v1208 = vunpack.c.l.bf16 %v794
    %v1209 = vunpack.c.h.bf16 %v794
    %v1210 = vunpack.c.l.bf16 %v795
    %v1211 = vunpack.c.h.bf16 %v795
    %v1212 = vunpack.c.l.bf16 %v796
    %v1213 = vunpack.c.h.bf16 %v796
    %v1214 = vunpack.c.l.bf16 %v797
    %v1215 = vunpack.c.h.bf16 %v797
    %v1216 = vunpack.c.l.bf16 %v798
    %v1217 = vunpack.c.h.bf16 %v798
    %v1218 = vunpack.c.l.bf16 %v799
    %v1219 = vunpack.c.h.bf16 %v799
    %v1220 = vunpack.c.l.bf16 %v800
    %v1221 = vunpack.c.h.bf16 %v800
    %v1222 = vunpack.c.l.bf16 %v801
    %v1223 = vunpack.c.h.bf16 %v801
    %v1224 = vunpack.c.l.bf16 %v802
    %v1225 = vunpack.c.h.bf16 %v802
    %v1226 = vunpack.c.l.bf16 %v803
    %v1227 = vunpack.c.h.bf16 %v803
    %v1228 = vunpack.c.l.bf16 %v804
    %v1229 = vunpack.c.h.bf16 %v804
    %v1230 = vunpack.c.l.bf16 %v805
    %v1231 = vunpack.c.h.bf16 %v805
    %v1232 = vunpack.c.l.bf16 %v806
    %v1233 = vunpack.c.h.bf16 %v806
    %v1234 = vunpack.c.l.bf16 %v807
    %v1235 = vunpack.c.h.bf16 %v807
    %v1236 = vunpack.c.l.bf16 %v808
    %v1237 = vunpack.c.h.bf16 %v808
    %v1238 = vunpack.c.l.bf16 %v809
    %v1239 = vunpack.c.h.bf16 %v809
    %v1240 = vunpack.c.l.bf16 %v810
    %v1241 = vunpack.c.h.bf16 %v810
    %v1242 = vunpack.c.l.bf16 %v811
    %v1243 = vunpack.c.h.bf16 %v811
    %v1244 = vunpack.c.l.bf16 %v812
    %v1245 = vunpack.c.h.bf16 %v812
    %v1246 = vunpack.c.l.bf16 %v813
    %v1247 = vunpack.c.h.bf16 %v813
    %v1248 = vunpack.c.l.bf16 %v814
    %v1249 = vunpack.c.h.bf16 %v814
    %v1250 = vunpack.c.l.bf16 %v815
    %v1251 = vunpack.c.h.bf16 %v815
    %v1252 = vunpack.c.l.bf16 %v816
    %v1253 = vunpack.c.h.bf16 %v816
    %v1254 = vunpack.c.l.bf16 %v817
    %v1255 = vunpack.c.h.bf16 %v817
    %v1256 = vunpack.c.l.bf16 %v818
    %v1257 = vunpack.c.h.bf16 %v818
    %v1258 = vunpack.c.l.bf16 %v819
    %v1259 = vunpack.c.h.bf16 %v819
    %v1260 = vunpack.c.l.bf16 %v820
    %v1261 = vunpack.c.h.bf16 %v820
    %v1262 = vunpack.c.l.bf16 %v821
    %v1263 = vunpack.c.h.bf16 %v821
    %v1264 = vunpack.c.l.bf16 %v822
    %v1265 = vunpack.c.h.bf16 %v822
    %v1266 = vunpack.c.l.bf16 %v823
    %v1267 = vunpack.c.h.bf16 %v823
    %v1268 = vunpack.c.l.bf16 %v824
    %v1269 = vunpack.c.h.bf16 %v824
    %v1270 = vunpack.c.l.bf16 %v825
    %v1271 = vunpack.c.h.bf16 %v825
    %v1272 = vunpack.c.l.bf16 %v826
    %v1273 = vunpack.c.h.bf16 %v826
    %v1274 = vunpack.c.l.bf16 %v827
    %v1275 = vunpack.c.h.bf16 %v827
    %v1276 = vunpack.c.l.bf16 %v828
    %v1277 = vunpack.c.h.bf16 %v828
    %v1278 = vunpack.c.l.bf16 %v829
    %v1279 = vunpack.c.h.bf16 %v829
    %v1280 = vunpack.c.l.bf16 %v830
    %v1281 = vunpack.c.h.bf16 %v830
    %v1282 = vunpack.c.l.bf16 %v831
    %v1283 = vunpack.c.h.bf16 %v831
    %v1284 = vunpack.c.l.bf16 %v832
    %v1285 = vunpack.c.h.bf16 %v832
    %v1286 = vunpack.c.l.bf16 %v833
    %v1287 = vunpack.c.h.bf16 %v833
    %v1288 = vunpack.c.l.bf16 %v834
    %v1289 = vunpack.c.h.bf16 %v834
    %v1290 = vunpack.c.l.bf16 %v835
    %v1291 = vunpack.c.h.bf16 %v835
    %v1292 = vunpack.c.l.bf16 %v836
    %v1293 = vunpack.c.h.bf16 %v836
    %v1294 = vunpack.c.l.bf16 %v837
    %v1295 = vunpack.c.h.bf16 %v837
    %v1296 = vunpack.c.l.bf16 %v838
    %v1297 = vunpack.c.h.bf16 %v838
    %v1298 = vunpack.c.l.bf16 %v839
    %v1299 = vunpack.c.h.bf16 %v839
    %v1300 = vunpack.c.l.bf16 %v840
    %v1301 = vunpack.c.h.bf16 %v840
    %v1302 = vunpack.c.l.bf16 %v841
    %v1303 = vunpack.c.h.bf16 %v841
    %v1304 = vunpack.c.l.bf16 %v842
    %v1305 = vunpack.c.h.bf16 %v842
    %v1306 = vunpack.c.l.bf16 %v843
    %v1307 = vunpack.c.h.bf16 %v843
    %v1308 = vunpack.c.l.bf16 %v844
    %v1309 = vunpack.c.h.bf16 %v844
    %v1310 = vunpack.c.l.bf16 %v845
    %v1311 = vunpack.c.h.bf16 %v845
    %v1312 = vunpack.c.l.bf16 %v846
    %v1313 = vunpack.c.h.bf16 %v846
    %v1314 = vunpack.c.l.bf16 %v847
    %v1315 = vunpack.c.h.bf16 %v847
    %v1316 = vunpack.c.l.bf16 %v848
    %v1317 = vunpack.c.h.bf16 %v848
    %v1318 = vunpack.c.l.bf16 %v849
    %v1319 = vunpack.c.h.bf16 %v849
    %v1320 = vunpack.c.l.bf16 %v850
    %v1321 = vunpack.c.h.bf16 %v850
    %v1322 = vunpack.c.l.bf16 %v851
    %v1323 = vunpack.c.h.bf16 %v851
    %v1324 = vunpack.c.l.bf16 %v852
    %v1325 = vunpack.c.h.bf16 %v852
    %v1326 = vunpack.c.l.bf16 %v853
    %v1327 = vunpack.c.h.bf16 %v853
    %v1328 = vunpack.c.l.bf16 %v854
    %v1329 = vunpack.c.h.bf16 %v854
    %v1330 = vunpack.c.l.bf16 %v855
    %v1331 = vunpack.c.h.bf16 %v855
    %v1332 = vunpack.c.l.bf16 %v856
    %v1333 = vunpack.c.h.bf16 %v856
    %v1334 = vunpack.c.l.bf16 %v857
    %v1335 = vunpack.c.h.bf16 %v857
    %v1336 = vunpack.c.l.bf16 %v858
    %v1337 = vunpack.c.h.bf16 %v858
    %v1338 = vunpack.c.l.bf16 %v859
    %v1339 = vunpack.c.h.bf16 %v859
    %v1340 = vunpack.c.l.bf16 %v860
    %v1341 = vunpack.c.h.bf16 %v860
    %v1342 = vunpack.c.l.bf16 %v861
    %v1343 = vunpack.c.h.bf16 %v861
    %v1344 = vunpack.c.l.bf16 %v862
    %v1345 = vunpack.c.h.bf16 %v862
    %v1346 = vunpack.c.l.bf16 %v863
    %v1347 = vunpack.c.h.bf16 %v863
    %v1348 = vunpack.c.l.bf16 %v864
    %v1349 = vunpack.c.h.bf16 %v864
    %v1350 = vunpack.c.l.bf16 %v865
    %v1351 = vunpack.c.h.bf16 %v865
    %v1352 = vunpack.c.l.bf16 %v866
    %v1353 = vunpack.c.h.bf16 %v866
    %v1354 = vunpack.c.l.bf16 %v867
    %v1355 = vunpack.c.h.bf16 %v867
    %v1356 = vunpack.c.l.bf16 %v868
    %v1357 = vunpack.c.h.bf16 %v868
    %v1358 = vunpack.c.l.bf16 %v869
    %v1359 = vunpack.c.h.bf16 %v869
    %v1360 = vunpack.c.l.bf16 %v870
    %v1361 = vunpack.c.h.bf16 %v870
    %v1362 = vunpack.c.l.bf16 %v871
    %v1363 = vunpack.c.h.bf16 %v871
    %v1364 = vunpack.c.l.bf16 %v872
    %v1365 = vunpack.c.h.bf16 %v872
    %v1366 = vunpack.c.l.bf16 %v873
    %v1367 = vunpack.c.h.bf16 %v873
    %v1368 = vunpack.c.l.bf16 %v874
    %v1369 = vunpack.c.h.bf16 %v874
    %v1370 = vunpack.c.l.bf16 %v875
    %v1371 = vunpack.c.h.bf16 %v875
    %v1372 = vunpack.c.l.bf16 %v876
    %v1373 = vunpack.c.h.bf16 %v876
    %v1374 = vunpack.c.l.bf16 %v877
    %v1375 = vunpack.c.h.bf16 %v877
    %v1376 = vunpack.c.l.bf16 %v878
    %v1377 = vunpack.c.h.bf16 %v878
    %v1378 = vunpack.c.l.bf16 %v879
    %v1379 = vunpack.c.h.bf16 %v879
    %v1380 = vunpack.c.l.bf16 %v880
    %v1381 = vunpack.c.h.bf16 %v880
    %v1382 = vunpack.c.l.bf16 %v881
    %v1383 = vunpack.c.h.bf16 %v881
    %v1384 = vunpack.c.l.bf16 %v882
    %v1385 = vunpack.c.h.bf16 %v882
    %v1386 = vunpack.c.l.bf16 %v883
    %v1387 = vunpack.c.h.bf16 %v883
    %v1388 = vunpack.c.l.bf16 %v884
    %v1389 = vunpack.c.h.bf16 %v884
    %v1390 = vunpack.c.l.bf16 %v885
    %v1391 = vunpack.c.h.bf16 %v885
    %v1392 = vunpack.c.l.bf16 %v886
    %v1393 = vunpack.c.h.bf16 %v886
    %v1394 = vunpack.c.l.bf16 %v887
    %v1395 = vunpack.c.h.bf16 %v887
    %v1396 = vunpack.c.l.bf16 %v888
    %v1397 = vunpack.c.h.bf16 %v888
    %v1398 = vunpack.c.l.bf16 %v889
    %v1399 = vunpack.c.h.bf16 %v889
    %v1400 = vunpack.c.l.bf16 %v890
    %v1401 = vunpack.c.h.bf16 %v890
    %v1402 = vunpack.c.l.bf16 %v891
    %v1403 = vunpack.c.h.bf16 %v891
    %v1404 = vld [vmem:[%s5] sm:$0xf]
    %v1406 = vlaneseq
    %v1407 = vshrl.u32 %v1406, 7
    %v1408 = vsub.s32 0, %v1407
    %v1409 = vrot.slane %v1404, %v1408
    %v1410 = vlaneseq
    %v1411 = vshrl.u32 %v1410, 7
    %v1412 = vsub.s32 1, %v1411
    %v1413 = vrot.slane %v1404, %v1412
    %v1414 = vlaneseq
    %v1415 = vshrl.u32 %v1414, 7
    %v1416 = vsub.s32 2, %v1415
    %v1417 = vrot.slane %v1404, %v1416
    %v1418 = vlaneseq
    %v1419 = vshrl.u32 %v1418, 7
    %v1420 = vsub.s32 3, %v1419
    %v1421 = vrot.slane %v1404, %v1420
    %1426 = vmatprep.subr.mxu0 %v893
    %1427 = vmatpush1.msra.mxu0 %v892
    %1428 = vmatprep.subr.mxu0 %v897
    %1429 = vmatpush1.msra.mxu0 %v896
    %1430 = vmatprep.subr.mxu0 %v901
    %1431 = vmatpush1.msra.mxu0 %v900
    %1432 = vmatprep.subr.mxu0 %v905
    %1433 = vmatpush1.msra.mxu0 %v904
    %1434 = vmatprep.subr.mxu0 %v909
    %1435 = vmatpush1.msra.mxu0 %v908
    %1436 = vmatprep.subr.mxu0 %v913
    %1437 = vmatpush1.msra.mxu0 %v912
    %1438 = vmatprep.subr.mxu0 %v917
    %1439 = vmatpush1.msra.mxu0 %v916
    %1440 = vmatprep.subr.mxu0 %v921
    %1441 = vmatpush1.msra.mxu0 %v920
    %1442 = vmatprep.subr.mxu0 %v925
    %1443 = vmatpush1.msra.mxu0 %v924
    %1444 = vmatprep.subr.mxu0 %v929
    %1445 = vmatpush1.msra.mxu0 %v928
    %1446 = vmatprep.subr.mxu0 %v933
    %1447 = vmatpush1.msra.mxu0 %v932
    %1448 = vmatprep.subr.mxu0 %v937
    %1449 = vmatpush1.msra.mxu0 %v936
    %1450 = vmatprep.subr.mxu0 %v941
    %1451 = vmatpush1.msra.mxu0 %v940
    %1452 = vmatprep.subr.mxu0 %v945
    %1453 = vmatpush1.msra.mxu0 %v944
    %1454 = vmatprep.subr.mxu0 %v949
    %1455 = vmatpush1.msra.mxu0 %v948
    %1456 = vmatprep.subr.mxu0 %v953
    %1457 = vmatpush1.msra.mxu0 %v952
    %1458 = vmatprep.subr.mxu0 %v957
    %1459 = vmatpush1.msra.mxu0 %v956
    %1460 = vmatprep.subr.mxu0 %v961
    %1461 = vmatpush1.msra.mxu0 %v960
    %1462 = vmatprep.subr.mxu0 %v965
    %1463 = vmatpush1.msra.mxu0 %v964
    %1464 = vmatprep.subr.mxu0 %v969
    %1465 = vmatpush1.msra.mxu0 %v968
    %1466 = vmatprep.subr.mxu0 %v973
    %1467 = vmatpush1.msra.mxu0 %v972
    %1468 = vmatprep.subr.mxu0 %v977
    %1469 = vmatpush1.msra.mxu0 %v976
    %1470 = vmatprep.subr.mxu0 %v981
    %1471 = vmatpush1.msra.mxu0 %v980
    %1472 = vmatprep.subr.mxu0 %v985
    %1473 = vmatpush1.msra.mxu0 %v984
    %1474 = vmatprep.subr.mxu0 %v989
    %1475 = vmatpush1.msra.mxu0 %v988
    %1476 = vmatprep.subr.mxu0 %v993
    %1477 = vmatpush1.msra.mxu0 %v992
    %1478 = vmatprep.subr.mxu0 %v997
    %1479 = vmatpush1.msra.mxu0 %v996
    %1480 = vmatprep.subr.mxu0 %v1001
    %1481 = vmatpush1.msra.mxu0 %v1000
    %1482 = vmatprep.subr.mxu0 %v1005
    %1483 = vmatpush1.msra.mxu0 %v1004
    %1484 = vmatprep.subr.mxu0 %v1009
    %1485 = vmatpush1.msra.mxu0 %v1008
    %1486 = vmatprep.subr.mxu0 %v1013
    %1487 = vmatpush1.msra.mxu0 %v1012
    %1488 = vmatprep.subr.mxu0 %v1017
    %1489 = vmatpush1.msra.mxu0 %v1016
    %1490 = vmatprep.mubr.f32.mxu0 %v629
    %1491 = vmatmul.mubr.f32.gmra.mrb[0].mxu0 %v628
    %v1492 = vpop.f32.mrb[0].mxu0
    %v1493 = vadd.f32 %v1409, %v1492
    %v1494 = vpop.f32.mrb[0].mxu0
    %v1495 = vadd.f32 %v1413, %v1494
    %1496 = vdwg.mxu0
    %1497 = vmatprep.subr.mxu0 %v1021
    %1498 = vmatpush1.msra.mxu0 %v1020
    %1499 = vmatprep.subr.mxu0 %v1025
    %1500 = vmatpush1.msra.mxu0 %v1024
    %1501 = vmatprep.subr.mxu0 %v1029
    %1502 = vmatpush1.msra.mxu0 %v1028
    %1503 = vmatprep.subr.mxu0 %v1033
    %1504 = vmatpush1.msra.mxu0 %v1032
    %1505 = vmatprep.subr.mxu0 %v1037
    %1506 = vmatpush1.msra.mxu0 %v1036
    %1507 = vmatprep.subr.mxu0 %v1041
    %1508 = vmatpush1.msra.mxu0 %v1040
    %1509 = vmatprep.subr.mxu0 %v1045
    %1510 = vmatpush1.msra.mxu0 %v1044
    %1511 = vmatprep.subr.mxu0 %v1049
    %1512 = vmatpush1.msra.mxu0 %v1048
    %1513 = vmatprep.subr.mxu0 %v1053
    %1514 = vmatpush1.msra.mxu0 %v1052
    %1515 = vmatprep.subr.mxu0 %v1057
    %1516 = vmatpush1.msra.mxu0 %v1056
    %1517 = vmatprep.subr.mxu0 %v1061
    %1518 = vmatpush1.msra.mxu0 %v1060
    %1519 = vmatprep.subr.mxu0 %v1065
    %1520 = vmatpush1.msra.mxu0 %v1064
    %1521 = vmatprep.subr.mxu0 %v1069
    %1522 = vmatpush1.msra.mxu0 %v1068
    %1523 = vmatprep.subr.mxu0 %v1073
    %1524 = vmatpush1.msra.mxu0 %v1072
    %1525 = vmatprep.subr.mxu0 %v1077
    %1526 = vmatpush1.msra.mxu0 %v1076
    %1527 = vmatprep.subr.mxu0 %v1081
    %1528 = vmatpush1.msra.mxu0 %v1080
    %1529 = vmatprep.subr.mxu0 %v1085
    %1530 = vmatpush1.msra.mxu0 %v1084
    %1531 = vmatprep.subr.mxu0 %v1089
    %1532 = vmatpush1.msra.mxu0 %v1088
    %1533 = vmatprep.subr.mxu0 %v1093
    %1534 = vmatpush1.msra.mxu0 %v1092
    %1535 = vmatprep.subr.mxu0 %v1097
    %1536 = vmatpush1.msra.mxu0 %v1096
    %1537 = vmatprep.subr.mxu0 %v1101
    %1538 = vmatpush1.msra.mxu0 %v1100
    %1539 = vmatprep.subr.mxu0 %v1105
    %1540 = vmatpush1.msra.mxu0 %v1104
    %1541 = vmatprep.subr.mxu0 %v1109
    %1542 = vmatpush1.msra.mxu0 %v1108
    %1543 = vmatprep.subr.mxu0 %v1113
    %1544 = vmatpush1.msra.mxu0 %v1112
    %1545 = vmatprep.subr.mxu0 %v1117
    %1546 = vmatpush1.msra.mxu0 %v1116
    %1547 = vmatprep.subr.mxu0 %v1121
    %1548 = vmatpush1.msra.mxu0 %v1120
    %1549 = vmatprep.subr.mxu0 %v1125
    %1550 = vmatpush1.msra.mxu0 %v1124
    %1551 = vmatprep.subr.mxu0 %v1129
    %1552 = vmatpush1.msra.mxu0 %v1128
    %1553 = vmatprep.subr.mxu0 %v1133
    %1554 = vmatpush1.msra.mxu0 %v1132
    %1555 = vmatprep.subr.mxu0 %v1137
    %1556 = vmatpush1.msra.mxu0 %v1136
    %1557 = vmatprep.subr.mxu0 %v1141
    %1558 = vmatpush1.msra.mxu0 %v1140
    %1559 = vmatprep.subr.mxu0 %v1145
    %1560 = vmatpush1.msra.mxu0 %v1144
    %1561 = vmatprep.mubr.f32.mxu0 %v631
    %1562 = vmatmul.mubr.f32.gmra.mrb[0].mxu0 %v630
    %v1563 = vpop.f32.mrb[0].mxu0
    %v1564 = vadd.f32 %v1493, %v1563
    %v1565 = vpop.f32.mrb[0].mxu0
    %v1566 = vadd.f32 %v1495, %v1565
    %1567 = vdwg.mxu0
    %1568 = vmatprep.subr.mxu0 %v1149
    %1569 = vmatpush1.msra.mxu0 %v1148
    %1570 = vmatprep.subr.mxu0 %v1153
    %1571 = vmatpush1.msra.mxu0 %v1152
    %1572 = vmatprep.subr.mxu0 %v1157
    %1573 = vmatpush1.msra.mxu0 %v1156
    %1574 = vmatprep.subr.mxu0 %v1161
    %1575 = vmatpush1.msra.mxu0 %v1160
    %1576 = vmatprep.subr.mxu0 %v1165
    %1577 = vmatpush1.msra.mxu0 %v1164
    %1578 = vmatprep.subr.mxu0 %v1169
    %1579 = vmatpush1.msra.mxu0 %v1168
    %1580 = vmatprep.subr.mxu0 %v1173
    %1581 = vmatpush1.msra.mxu0 %v1172
    %1582 = vmatprep.subr.mxu0 %v1177
    %1583 = vmatpush1.msra.mxu0 %v1176
    %1584 = vmatprep.subr.mxu0 %v1181
    %1585 = vmatpush1.msra.mxu0 %v1180
    %1586 = vmatprep.subr.mxu0 %v1185
    %1587 = vmatpush1.msra.mxu0 %v1184
    %1588 = vmatprep.subr.mxu0 %v1189
    %1589 = vmatpush1.msra.mxu0 %v1188
    %1590 = vmatprep.subr.mxu0 %v1193
    %1591 = vmatpush1.msra.mxu0 %v1192
    %1592 = vmatprep.subr.mxu0 %v1197
    %1593 = vmatpush1.msra.mxu0 %v1196
    %1594 = vmatprep.subr.mxu0 %v1201
    %1595 = vmatpush1.msra.mxu0 %v1200
    %1596 = vmatprep.subr.mxu0 %v1205
    %1597 = vmatpush1.msra.mxu0 %v1204
    %1598 = vmatprep.subr.mxu0 %v1209
    %1599 = vmatpush1.msra.mxu0 %v1208
    %1600 = vmatprep.subr.mxu0 %v1213
    %1601 = vmatpush1.msra.mxu0 %v1212
    %1602 = vmatprep.subr.mxu0 %v1217
    %1603 = vmatpush1.msra.mxu0 %v1216
    %1604 = vmatprep.subr.mxu0 %v1221
    %1605 = vmatpush1.msra.mxu0 %v1220
    %1606 = vmatprep.subr.mxu0 %v1225
    %1607 = vmatpush1.msra.mxu0 %v1224
    %1608 = vmatprep.subr.mxu0 %v1229
    %1609 = vmatpush1.msra.mxu0 %v1228
    %1610 = vmatprep.subr.mxu0 %v1233
    %1611 = vmatpush1.msra.mxu0 %v1232
    %1612 = vmatprep.subr.mxu0 %v1237
    %1613 = vmatpush1.msra.mxu0 %v1236
    %1614 = vmatprep.subr.mxu0 %v1241
    %1615 = vmatpush1.msra.mxu0 %v1240
    %1616 = vmatprep.subr.mxu0 %v1245
    %1617 = vmatpush1.msra.mxu0 %v1244
    %1618 = vmatprep.subr.mxu0 %v1249
    %1619 = vmatpush1.msra.mxu0 %v1248
    %1620 = vmatprep.subr.mxu0 %v1253
    %1621 = vmatpush1.msra.mxu0 %v1252
    %1622 = vmatprep.subr.mxu0 %v1257
    %1623 = vmatpush1.msra.mxu0 %v1256
    %1624 = vmatprep.subr.mxu0 %v1261
    %1625 = vmatpush1.msra.mxu0 %v1260
    %1626 = vmatprep.subr.mxu0 %v1265
    %1627 = vmatpush1.msra.mxu0 %v1264
    %1628 = vmatprep.subr.mxu0 %v1269
    %1629 = vmatpush1.msra.mxu0 %v1268
    %1630 = vmatprep.subr.mxu0 %v1273
    %1631 = vmatpush1.msra.mxu0 %v1272
    %1632 = vmatprep.mubr.f32.mxu0 %v633
    %1633 = vmatmul.mubr.f32.gmra.mrb[0].mxu0 %v632
    %v1634 = vpop.f32.mrb[0].mxu0
    %v1635 = vadd.f32 %v1564, %v1634
    %v1636 = vpop.f32.mrb[0].mxu0
    %v1637 = vadd.f32 %v1566, %v1636
    %1638 = vdwg.mxu0
    %1639 = vmatprep.subr.mxu0 %v1277
    %1640 = vmatpush1.msra.mxu0 %v1276
    %1641 = vmatprep.subr.mxu0 %v1281
    %1642 = vmatpush1.msra.mxu0 %v1280
    %1643 = vmatprep.subr.mxu0 %v1285
    %1644 = vmatpush1.msra.mxu0 %v1284
    %1645 = vmatprep.subr.mxu0 %v1289
    %1646 = vmatpush1.msra.mxu0 %v1288
    %1647 = vmatprep.subr.mxu0 %v1293
    %1648 = vmatpush1.msra.mxu0 %v1292
    %1649 = vmatprep.subr.mxu0 %v1297
    %1650 = vmatpush1.msra.mxu0 %v1296
    %1651 = vmatprep.subr.mxu0 %v1301
    %1652 = vmatpush1.msra.mxu0 %v1300
    %1653 = vmatprep.subr.mxu0 %v1305
    %1654 = vmatpush1.msra.mxu0 %v1304
    %1655 = vmatprep.subr.mxu0 %v1309
    %1656 = vmatpush1.msra.mxu0 %v1308
    %1657 = vmatprep.subr.mxu0 %v1313
    %1658 = vmatpush1.msra.mxu0 %v1312
    %1659 = vmatprep.subr.mxu0 %v1317
    %1660 = vmatpush1.msra.mxu0 %v1316
    %1661 = vmatprep.subr.mxu0 %v1321
    %1662 = vmatpush1.msra.mxu0 %v1320
    %1663 = vmatprep.subr.mxu0 %v1325
    %1664 = vmatpush1.msra.mxu0 %v1324
    %1665 = vmatprep.subr.mxu0 %v1329
    %1666 = vmatpush1.msra.mxu0 %v1328
    %1667 = vmatprep.subr.mxu0 %v1333
    %1668 = vmatpush1.msra.mxu0 %v1332
    %1669 = vmatprep.subr.mxu0 %v1337
    %1670 = vmatpush1.msra.mxu0 %v1336
    %1671 = vmatprep.subr.mxu0 %v1341
    %1672 = vmatpush1.msra.mxu0 %v1340
    %1673 = vmatprep.subr.mxu0 %v1345
    %1674 = vmatpush1.msra.mxu0 %v1344
    %1675 = vmatprep.subr.mxu0 %v1349
    %1676 = vmatpush1.msra.mxu0 %v1348
    %1677 = vmatprep.subr.mxu0 %v1353
    %1678 = vmatpush1.msra.mxu0 %v1352
    %1679 = vmatprep.subr.mxu0 %v1357
    %1680 = vmatpush1.msra.mxu0 %v1356
    %1681 = vmatprep.subr.mxu0 %v1361
    %1682 = vmatpush1.msra.mxu0 %v1360
    %1683 = vmatprep.subr.mxu0 %v1365
    %1684 = vmatpush1.msra.mxu0 %v1364
    %1685 = vmatprep.subr.mxu0 %v1369
    %1686 = vmatpush1.msra.mxu0 %v1368
    %1687 = vmatprep.subr.mxu0 %v1373
    %1688 = vmatpush1.msra.mxu0 %v1372
    %1689 = vmatprep.subr.mxu0 %v1377
    %1690 = vmatpush1.msra.mxu0 %v1376
    %1691 = vmatprep.subr.mxu0 %v1381
    %1692 = vmatpush1.msra.mxu0 %v1380
    %1693 = vmatprep.subr.mxu0 %v1385
    %1694 = vmatpush1.msra.mxu0 %v1384
    %1695 = vmatprep.subr.mxu0 %v1389
    %1696 = vmatpush1.msra.mxu0 %v1388
    %1697 = vmatprep.subr.mxu0 %v1393
    %1698 = vmatpush1.msra.mxu0 %v1392
    %1699 = vmatprep.subr.mxu0 %v1397
    %1700 = vmatpush1.msra.mxu0 %v1396
    %1701 = vmatprep.subr.mxu0 %v1401
    %1702 = vmatpush1.msra.mxu0 %v1400
    %1703 = vmatprep.mubr.f32.mxu0 %v635
    %1704 = vmatmul.mubr.f32.gmra.mrb[0].mxu0 %v634
    %v1705 = vpop.f32.mrb[0].mxu0
    %v1706 = vadd.f32 %v1635, %v1705
    %v1707 = vpop.f32.mrb[0].mxu0
    %v1708 = vadd.f32 %v1637, %v1707
    %1709 = vdwg.mxu0
    %1710 = vmatprep.subr.mxu0 %v895
    %1711 = vmatpush1.msra.mxu0 %v894
    %1712 = vmatprep.subr.mxu0 %v899
    %1713 = vmatpush1.msra.mxu0 %v898
    %1714 = vmatprep.subr.mxu0 %v903
    %1715 = vmatpush1.msra.mxu0 %v902
    %1716 = vmatprep.subr.mxu0 %v907
    %1717 = vmatpush1.msra.mxu0 %v906
    %1718 = vmatprep.subr.mxu0 %v911
    %1719 = vmatpush1.msra.mxu0 %v910
    %1720 = vmatprep.subr.mxu0 %v915
    %1721 = vmatpush1.msra.mxu0 %v914
    %1722 = vmatprep.subr.mxu0 %v919
    %1723 = vmatpush1.msra.mxu0 %v918
    %1724 = vmatprep.subr.mxu0 %v923
    %1725 = vmatpush1.msra.mxu0 %v922
    %1726 = vmatprep.subr.mxu0 %v927
    %1727 = vmatpush1.msra.mxu0 %v926
    %1728 = vmatprep.subr.mxu0 %v931
    %1729 = vmatpush1.msra.mxu0 %v930
    %1730 = vmatprep.subr.mxu0 %v935
    %1731 = vmatpush1.msra.mxu0 %v934
    %1732 = vmatprep.subr.mxu0 %v939
    %1733 = vmatpush1.msra.mxu0 %v938
    %1734 = vmatprep.subr.mxu0 %v943
    %1735 = vmatpush1.msra.mxu0 %v942
    %1736 = vmatprep.subr.mxu0 %v947
    %1737 = vmatpush1.msra.mxu0 %v946
    %1738 = vmatprep.subr.mxu0 %v951
    %1739 = vmatpush1.msra.mxu0 %v950
    %1740 = vmatprep.subr.mxu0 %v955
    %1741 = vmatpush1.msra.mxu0 %v954
    %1742 = vmatprep.subr.mxu0 %v959
    %1743 = vmatpush1.msra.mxu0 %v958
    %1744 = vmatprep.subr.mxu0 %v963
    %1745 = vmatpush1.msra.mxu0 %v962
    %1746 = vmatprep.subr.mxu0 %v967
    %1747 = vmatpush1.msra.mxu0 %v966
    %1748 = vmatprep.subr.mxu0 %v971
    %1749 = vmatpush1.msra.mxu0 %v970
    %1750 = vmatprep.subr.mxu0 %v975
    %1751 = vmatpush1.msra.mxu0 %v974
    %1752 = vmatprep.subr.mxu0 %v979
    %1753 = vmatpush1.msra.mxu0 %v978
    %1754 = vmatprep.subr.mxu0 %v983
    %1755 = vmatpush1.msra.mxu0 %v982
    %1756 = vmatprep.subr.mxu0 %v987
    %1757 = vmatpush1.msra.mxu0 %v986
    %1758 = vmatprep.subr.mxu0 %v991
    %1759 = vmatpush1.msra.mxu0 %v990
    %1760 = vmatprep.subr.mxu0 %v995
    %1761 = vmatpush1.msra.mxu0 %v994
    %1762 = vmatprep.subr.mxu0 %v999
    %1763 = vmatpush1.msra.mxu0 %v998
    %1764 = vmatprep.subr.mxu0 %v1003
    %1765 = vmatpush1.msra.mxu0 %v1002
    %1766 = vmatprep.subr.mxu0 %v1007
    %1767 = vmatpush1.msra.mxu0 %v1006
    %1768 = vmatprep.subr.mxu0 %v1011
    %1769 = vmatpush1.msra.mxu0 %v1010
    %1770 = vmatprep.subr.mxu0 %v1015
    %1771 = vmatpush1.msra.mxu0 %v1014
    %1772 = vmatprep.subr.mxu0 %v1019
    %1773 = vmatpush1.msra.mxu0 %v1018
    %1774 = vmatprep.mubr.f32.mxu0 %v629
    %1775 = vmatmul.mubr.f32.gmra.mrb[0].mxu0 %v628
    %v1776 = vpop.f32.mrb[0].mxu0
    %v1777 = vadd.f32 %v1417, %v1776
    %v1778 = vpop.f32.mrb[0].mxu0
    %v1779 = vadd.f32 %v1421, %v1778
    %1780 = vdwg.mxu0
    %1781 = vmatprep.subr.mxu0 %v1023
    %1782 = vmatpush1.msra.mxu0 %v1022
    %1783 = vmatprep.subr.mxu0 %v1027
    %1784 = vmatpush1.msra.mxu0 %v1026
    %1785 = vmatprep.subr.mxu0 %v1031
    %1786 = vmatpush1.msra.mxu0 %v1030
    %1787 = vmatprep.subr.mxu0 %v1035
    %1788 = vmatpush1.msra.mxu0 %v1034
    %1789 = vmatprep.subr.mxu0 %v1039
    %1790 = vmatpush1.msra.mxu0 %v1038
    %1791 = vmatprep.subr.mxu0 %v1043
    %1792 = vmatpush1.msra.mxu0 %v1042
    %1793 = vmatprep.subr.mxu0 %v1047
    %1794 = vmatpush1.msra.mxu0 %v1046
    %1795 = vmatprep.subr.mxu0 %v1051
    %1796 = vmatpush1.msra.mxu0 %v1050
    %1797 = vmatprep.subr.mxu0 %v1055
    %1798 = vmatpush1.msra.mxu0 %v1054
    %1799 = vmatprep.subr.mxu0 %v1059
    %1800 = vmatpush1.msra.mxu0 %v1058
    %1801 = vmatprep.subr.mxu0 %v1063
    %1802 = vmatpush1.msra.mxu0 %v1062
    %1803 = vmatprep.subr.mxu0 %v1067
    %1804 = vmatpush1.msra.mxu0 %v1066
    %1805 = vmatprep.subr.mxu0 %v1071
    %1806 = vmatpush1.msra.mxu0 %v1070
    %1807 = vmatprep.subr.mxu0 %v1075
    %1808 = vmatpush1.msra.mxu0 %v1074
    %1809 = vmatprep.subr.mxu0 %v1079
    %1810 = vmatpush1.msra.mxu0 %v1078
    %1811 = vmatprep.subr.mxu0 %v1083
    %1812 = vmatpush1.msra.mxu0 %v1082
    %1813 = vmatprep.subr.mxu0 %v1087
    %1814 = vmatpush1.msra.mxu0 %v1086
    %1815 = vmatprep.subr.mxu0 %v1091
    %1816 = vmatpush1.msra.mxu0 %v1090
    %1817 = vmatprep.subr.mxu0 %v1095
    %1818 = vmatpush1.msra.mxu0 %v1094
    %1819 = vmatprep.subr.mxu0 %v1099
    %1820 = vmatpush1.msra.mxu0 %v1098
    %1821 = vmatprep.subr.mxu0 %v1103
    %1822 = vmatpush1.msra.mxu0 %v1102
    %1823 = vmatprep.subr.mxu0 %v1107
    %1824 = vmatpush1.msra.mxu0 %v1106
    %1825 = vmatprep.subr.mxu0 %v1111
    %1826 = vmatpush1.msra.mxu0 %v1110
    %1827 = vmatprep.subr.mxu0 %v1115
    %1828 = vmatpush1.msra.mxu0 %v1114
    %1829 = vmatprep.subr.mxu0 %v1119
    %1830 = vmatpush1.msra.mxu0 %v1118
    %1831 = vmatprep.subr.mxu0 %v1123
    %1832 = vmatpush1.msra.mxu0 %v1122
    %1833 = vmatprep.subr.mxu0 %v1127
    %1834 = vmatpush1.msra.mxu0 %v1126
    %1835 = vmatprep.subr.mxu0 %v1131
    %1836 = vmatpush1.msra.mxu0 %v1130
    %1837 = vmatprep.subr.mxu0 %v1135
    %1838 = vmatpush1.msra.mxu0 %v1134
    %1839 = vmatprep.subr.mxu0 %v1139
    %1840 = vmatpush1.msra.mxu0 %v1138
    %1841 = vmatprep.subr.mxu0 %v1143
    %1842 = vmatpush1.msra.mxu0 %v1142
    %1843 = vmatprep.subr.mxu0 %v1147
    %1844 = vmatpush1.msra.mxu0 %v1146
    %1845 = vmatprep.mubr.f32.mxu0 %v631
    %1846 = vmatmul.mubr.f32.gmra.mrb[0].mxu0 %v630
    %v1847 = vpop.f32.mrb[0].mxu0
    %v1848 = vadd.f32 %v1777, %v1847
    %v1849 = vpop.f32.mrb[0].mxu0
    %v1850 = vadd.f32 %v1779, %v1849
    %1851 = vdwg.mxu0
    %1852 = vmatprep.subr.mxu0 %v1151
    %1853 = vmatpush1.msra.mxu0 %v1150
    %1854 = vmatprep.subr.mxu0 %v1155
    %1855 = vmatpush1.msra.mxu0 %v1154
    %1856 = vmatprep.subr.mxu0 %v1159
    %1857 = vmatpush1.msra.mxu0 %v1158
    %1858 = vmatprep.subr.mxu0 %v1163
    %1859 = vmatpush1.msra.mxu0 %v1162
    %1860 = vmatprep.subr.mxu0 %v1167
    %1861 = vmatpush1.msra.mxu0 %v1166
    %1862 = vmatprep.subr.mxu0 %v1171
    %1863 = vmatpush1.msra.mxu0 %v1170
    %1864 = vmatprep.subr.mxu0 %v1175
    %1865 = vmatpush1.msra.mxu0 %v1174
    %1866 = vmatprep.subr.mxu0 %v1179
    %1867 = vmatpush1.msra.mxu0 %v1178
    %1868 = vmatprep.subr.mxu0 %v1183
    %1869 = vmatpush1.msra.mxu0 %v1182
    %1870 = vmatprep.subr.mxu0 %v1187
    %1871 = vmatpush1.msra.mxu0 %v1186
    %1872 = vmatprep.subr.mxu0 %v1191
    %1873 = vmatpush1.msra.mxu0 %v1190
    %1874 = vmatprep.subr.mxu0 %v1195
    %1875 = vmatpush1.msra.mxu0 %v1194
    %1876 = vmatprep.subr.mxu0 %v1199
    %1877 = vmatpush1.msra.mxu0 %v1198
    %1878 = vmatprep.subr.mxu0 %v1203
    %1879 = vmatpush1.msra.mxu0 %v1202
    %1880 = vmatprep.subr.mxu0 %v1207
    %1881 = vmatpush1.msra.mxu0 %v1206
    %1882 = vmatprep.subr.mxu0 %v1211
    %1883 = vmatpush1.msra.mxu0 %v1210
    %1884 = vmatprep.subr.mxu0 %v1215
    %1885 = vmatpush1.msra.mxu0 %v1214
    %1886 = vmatprep.subr.mxu0 %v1219
    %1887 = vmatpush1.msra.mxu0 %v1218
    %1888 = vmatprep.subr.mxu0 %v1223
    %1889 = vmatpush1.msra.mxu0 %v1222
    %1890 = vmatprep.subr.mxu0 %v1227
    %1891 = vmatpush1.msra.mxu0 %v1226
    %1892 = vmatprep.subr.mxu0 %v1231
    %1893 = vmatpush1.msra.mxu0 %v1230
    %1894 = vmatprep.subr.mxu0 %v1235
    %1895 = vmatpush1.msra.mxu0 %v1234
    %1896 = vmatprep.subr.mxu0 %v1239
    %1897 = vmatpush1.msra.mxu0 %v1238
    %1898 = vmatprep.subr.mxu0 %v1243
    %1899 = vmatpush1.msra.mxu0 %v1242
    %1900 = vmatprep.subr.mxu0 %v1247
    %1901 = vmatpush1.msra.mxu0 %v1246
    %1902 = vmatprep.subr.mxu0 %v1251
    %1903 = vmatpush1.msra.mxu0 %v1250
    %1904 = vmatprep.subr.mxu0 %v1255
    %1905 = vmatpush1.msra.mxu0 %v1254
    %1906 = vmatprep.subr.mxu0 %v1259
    %1907 = vmatpush1.msra.mxu0 %v1258
    %1908 = vmatprep.subr.mxu0 %v1263
    %1909 = vmatpush1.msra.mxu0 %v1262
    %1910 = vmatprep.subr.mxu0 %v1267
    %1911 = vmatpush1.msra.mxu0 %v1266
    %1912 = vmatprep.subr.mxu0 %v1271
    %1913 = vmatpush1.msra.mxu0 %v1270
    %1914 = vmatprep.subr.mxu0 %v1275
    %1915 = vmatpush1.msra.mxu0 %v1274
    %1916 = vmatprep.mubr.f32.mxu0 %v633
    %1917 = vmatmul.mubr.f32.gmra.mrb[0].mxu0 %v632
    %v1918 = vpop.f32.mrb[0].mxu0
    %v1919 = vadd.f32 %v1848, %v1918
    %v1920 = vpop.f32.mrb[0].mxu0
    %v1921 = vadd.f32 %v1850, %v1920
    %1922 = vdwg.mxu0
    %1923 = vmatprep.subr.mxu0 %v1279
    %1924 = vmatpush1.msra.mxu0 %v1278
    %1925 = vmatprep.subr.mxu0 %v1283
    %1926 = vmatpush1.msra.mxu0 %v1282
    %1927 = vmatprep.subr.mxu0 %v1287
    %1928 = vmatpush1.msra.mxu0 %v1286
    %1929 = vmatprep.subr.mxu0 %v1291
    %1930 = vmatpush1.msra.mxu0 %v1290
    %1931 = vmatprep.subr.mxu0 %v1295
    %1932 = vmatpush1.msra.mxu0 %v1294
    %1933 = vmatprep.subr.mxu0 %v1299
    %1934 = vmatpush1.msra.mxu0 %v1298
    %1935 = vmatprep.subr.mxu0 %v1303
    %1936 = vmatpush1.msra.mxu0 %v1302
    %1937 = vmatprep.subr.mxu0 %v1307
    %1938 = vmatpush1.msra.mxu0 %v1306
    %1939 = vmatprep.subr.mxu0 %v1311
    %1940 = vmatpush1.msra.mxu0 %v1310
    %1941 = vmatprep.subr.mxu0 %v1315
    %1942 = vmatpush1.msra.mxu0 %v1314
    %1943 = vmatprep.subr.mxu0 %v1319
    %1944 = vmatpush1.msra.mxu0 %v1318
    %1945 = vmatprep.subr.mxu0 %v1323
    %1946 = vmatpush1.msra.mxu0 %v1322
    %1947 = vmatprep.subr.mxu0 %v1327
    %1948 = vmatpush1.msra.mxu0 %v1326
    %1949 = vmatprep.subr.mxu0 %v1331
    %1950 = vmatpush1.msra.mxu0 %v1330
    %1951 = vmatprep.subr.mxu0 %v1335
    %1952 = vmatpush1.msra.mxu0 %v1334
    %1953 = vmatprep.subr.mxu0 %v1339
    %1954 = vmatpush1.msra.mxu0 %v1338
    %1955 = vmatprep.subr.mxu0 %v1343
    %1956 = vmatpush1.msra.mxu0 %v1342
    %1957 = vmatprep.subr.mxu0 %v1347
    %1958 = vmatpush1.msra.mxu0 %v1346
    %1959 = vmatprep.subr.mxu0 %v1351
    %1960 = vmatpush1.msra.mxu0 %v1350
    %1961 = vmatprep.subr.mxu0 %v1355
    %1962 = vmatpush1.msra.mxu0 %v1354
    %1963 = vmatprep.subr.mxu0 %v1359
    %1964 = vmatpush1.msra.mxu0 %v1358
    %1965 = vmatprep.subr.mxu0 %v1363
    %1966 = vmatpush1.msra.mxu0 %v1362
    %1967 = vmatprep.subr.mxu0 %v1367
    %1968 = vmatpush1.msra.mxu0 %v1366
    %1969 = vmatprep.subr.mxu0 %v1371
    %1970 = vmatpush1.msra.mxu0 %v1370
    %1971 = vmatprep.subr.mxu0 %v1375
    %1972 = vmatpush1.msra.mxu0 %v1374
    %1973 = vmatprep.subr.mxu0 %v1379
    %1974 = vmatpush1.msra.mxu0 %v1378
    %1975 = vmatprep.subr.mxu0 %v1383
    %1976 = vmatpush1.msra.mxu0 %v1382
    %1977 = vmatprep.subr.mxu0 %v1387
    %1978 = vmatpush1.msra.mxu0 %v1386
    %1979 = vmatprep.subr.mxu0 %v1391
    %1980 = vmatpush1.msra.mxu0 %v1390
    %1981 = vmatprep.subr.mxu0 %v1395
    %1982 = vmatpush1.msra.mxu0 %v1394
    %1983 = vmatprep.subr.mxu0 %v1399
    %1984 = vmatpush1.msra.mxu0 %v1398
    %1985 = vmatprep.subr.mxu0 %v1403
    %1986 = vmatpush1.msra.mxu0 %v1402
    %1987 = vmatprep.mubr.f32.mxu0 %v635
    %1988 = vmatmul.mubr.f32.gmra.mrb[0].mxu0 %v634
    %v1989 = vpop.f32.mrb[0].mxu0
    %v1990 = vadd.f32 %v1919, %v1989
    %v1991 = vpop.f32.mrb[0].mxu0
    %v1992 = vadd.f32 %v1921, %v1991
    %1993 = vdwg.mxu0
    %vm1994 = vcmp.gt.f32.partialorder %v1706, 0.0
    %vm1995 = vcmp.gt.f32.partialorder %v1708, 0.0
    %vm1996 = vcmp.gt.f32.partialorder %v1990, 0.0
    %vm1997 = vcmp.gt.f32.partialorder %v1992, 0.0
    %v1998 = vmul.f32 %v1706, 0.2
    %v1999 = vmul.f32 %v1708, 0.2
    %v2000 = vmul.f32 %v1990, 0.2
    %v2001 = vmul.f32 %v1992, 0.2
    %v2002 = vsel %vm1994, %v1706, %v1998
    %v2003 = vsel %vm1995, %v1708, %v1999
    %v2004 = vsel %vm1996, %v1990, %v2000
    %v2005 = vsel %vm1997, %v1992, %v2001
    %s2006 = sadd.s32 %s103, 2238012538
    %v2007 = vstv %s2006
    %v2008 = vxor.u32 %v530, %v2007
    %v2009 = vxor.u32 %v531, %v2007
    %v2010 = vxor.u32 %v532, %v2007
    %v2011 = vxor.u32 %v533, %v2007
    %v2012 = vshrl.u32 %v2008, 16
    %v2013 = vshrl.u32 %v2009, 16
    %v2014 = vshrl.u32 %v2010, 16
    %v2015 = vshrl.u32 %v2011, 16
    %v2016 = vxor.u32 %v2008, %v2012
    %v2017 = vxor.u32 %v2009, %v2013
    %v2018 = vxor.u32 %v2010, %v2014
    %v2019 = vxor.u32 %v2011, %v2015
    %v2020 = vmul.u32 %v2016, 2146121005
    %v2021 = vmul.u32 %v2017, 2146121005
    %v2022 = vmul.u32 %v2018, 2146121005
    %v2023 = vmul.u32 %v2019, 2146121005
    %v2024 = vshrl.u32 %v2020, 15
    %v2025 = vshrl.u32 %v2021, 15
    %v2026 = vshrl.u32 %v2022, 15
    %v2027 = vshrl.u32 %v2023, 15
    %v2028 = vxor.u32 %v2020, %v2024
    %v2029 = vxor.u32 %v2021, %v2025
    %v2030 = vxor.u32 %v2022, %v2026
    %v2031 = vxor.u32 %v2023, %v2027
    %v2032 = vmul.u32 %v2028, 2221713035
    %v2033 = vmul.u32 %v2029, 2221713035
    %v2034 = vmul.u32 %v2030, 2221713035
    %v2035 = vmul.u32 %v2031, 2221713035
    %v2036 = vshrl.u32 %v2032, 16
    %v2037 = vshrl.u32 %v2033, 16
    %v2038 = vshrl.u32 %v2034, 16
    %v2039 = vshrl.u32 %v2035, 16
    %v2040 = vxor.u32 %v2032, %v2036
    %v2041 = vxor.u32 %v2033, %v2037
    %v2042 = vxor.u32 %v2034, %v2038
    %v2043 = vxor.u32 %v2035, %v2039
    %vm2044 = vcmp.ge.u32.totalorder %v2040, 1288490188
    %vm2045 = vcmp.ge.u32.totalorder %v2041, 1288490188
    %vm2046 = vcmp.ge.u32.totalorder %v2042, 1288490188
    %vm2047 = vcmp.ge.u32.totalorder %v2043, 1288490188
    %v2048 = vmul.f32 %v2002, 1.4285715
    %v2049 = vmul.f32 %v2003, 1.4285715
    %v2050 = vmul.f32 %v2004, 1.4285715
    %v2051 = vmul.f32 %v2005, 1.4285715
    %v2052 = vsel %vm2044, %v2048, 0.0
    %v2053 = vsel %vm2045, %v2049, 0.0
    %v2054 = vsel %vm2046, %v2050, 0.0
    %v2055 = vsel %vm2047, %v2051, 0.0
    %v2056 = vld [vmem:[#allocation9] sm:$0xff]
    %v2057 = vld [vmem:[#allocation9 + $0x8] sm:$0xff]
    %v2058 = vld [vmem:[#allocation9 + $0x10] sm:$0xff]
    %v2059 = vld [vmem:[#allocation9 + $0x18] sm:$0xff]
    %v2060 = vld [vmem:[#allocation9 + $0x20] sm:$0xff]
    %v2061 = vld [vmem:[#allocation9 + $0x28] sm:$0xff]
    %v2062 = vld [vmem:[#allocation9 + $0x30] sm:$0xff]
    %v2063 = vld [vmem:[#allocation9 + $0x38] sm:$0xff]
    %v2064 = vld [vmem:[#allocation9 + $0x40] sm:$0xff]
    %v2065 = vld [vmem:[#allocation9 + $0x48] sm:$0xff]
    %v2066 = vld [vmem:[#allocation9 + $0x50] sm:$0xff]
    %v2067 = vld [vmem:[#allocation9 + $0x58] sm:$0xff]
    %v2068 = vld [vmem:[#allocation9 + $0x60] sm:$0xff]
    %v2069 = vld [vmem:[#allocation9 + $0x68] sm:$0xff]
    %v2070 = vld [vmem:[#allocation9 + $0x70] sm:$0xff]
    %v2071 = vld [vmem:[#allocation9 + $0x78] sm:$0xff]
    %v2072 = vld [vmem:[#allocation9 + $0x80] sm:$0xff]
    %v2073 = vld [vmem:[#allocation9 + $0x88] sm:$0xff]
    %v2074 = vld [vmem:[#allocation9 + $0x90] sm:$0xff]
    %v2075 = vld [vmem:[#allocation9 + $0x98] sm:$0xff]
    %v2076 = vld [vmem:[#allocation9 + $0xa0] sm:$0xff]
    %v2077 = vld [vmem:[#allocation9 + $0xa8] sm:$0xff]
    %v2078 = vld [vmem:[#allocation9 + $0xb0] sm:$0xff]
    %v2079 = vld [vmem:[#allocation9 + $0xb8] sm:$0xff]
    %v2080 = vld [vmem:[#allocation9 + $0xc0] sm:$0xff]
    %v2081 = vld [vmem:[#allocation9 + $0xc8] sm:$0xff]
    %v2082 = vld [vmem:[#allocation9 + $0xd0] sm:$0xff]
    %v2083 = vld [vmem:[#allocation9 + $0xd8] sm:$0xff]
    %v2084 = vld [vmem:[#allocation9 + $0xe0] sm:$0xff]
    %v2085 = vld [vmem:[#allocation9 + $0xe8] sm:$0xff]
    %v2086 = vld [vmem:[#allocation9 + $0xf0] sm:$0xff]
    %v2087 = vld [vmem:[#allocation9 + $0xf8] sm:$0xff]
    %v2088 = vld [vmem:[#allocation9 + $0x100] sm:$0xff]
    %v2089 = vld [vmem:[#allocation9 + $0x108] sm:$0xff]
    %v2090 = vld [vmem:[#allocation9 + $0x110] sm:$0xff]
    %v2091 = vld [vmem:[#allocation9 + $0x118] sm:$0xff]
    %v2092 = vld [vmem:[#allocation9 + $0x120] sm:$0xff]
    %v2093 = vld [vmem:[#allocation9 + $0x128] sm:$0xff]
    %v2094 = vld [vmem:[#allocation9 + $0x130] sm:$0xff]
    %v2095 = vld [vmem:[#allocation9 + $0x138] sm:$0xff]
    %v2096 = vld [vmem:[#allocation9 + $0x140] sm:$0xff]
    %v2097 = vld [vmem:[#allocation9 + $0x148] sm:$0xff]
    %v2098 = vld [vmem:[#allocation9 + $0x150] sm:$0xff]
    %v2099 = vld [vmem:[#allocation9 + $0x158] sm:$0xff]
    %v2100 = vld [vmem:[#allocation9 + $0x160] sm:$0xff]
    %v2101 = vld [vmem:[#allocation9 + $0x168] sm:$0xff]
    %v2102 = vld [vmem:[#allocation9 + $0x170] sm:$0xff]
    %v2103 = vld [vmem:[#allocation9 + $0x178] sm:$0xff]
    %v2104 = vld [vmem:[#allocation9 + $0x180] sm:$0xff]
    %v2105 = vld [vmem:[#allocation9 + $0x188] sm:$0xff]
    %v2106 = vld [vmem:[#allocation9 + $0x190] sm:$0xff]
    %v2107 = vld [vmem:[#allocation9 + $0x198] sm:$0xff]
    %v2108 = vld [vmem:[#allocation9 + $0x1a0] sm:$0xff]
    %v2109 = vld [vmem:[#allocation9 + $0x1a8] sm:$0xff]
    %v2110 = vld [vmem:[#allocation9 + $0x1b0] sm:$0xff]
    %v2111 = vld [vmem:[#allocation9 + $0x1b8] sm:$0xff]
    %v2112 = vld [vmem:[#allocation9 + $0x1c0] sm:$0xff]
    %v2113 = vld [vmem:[#allocation9 + $0x1c8] sm:$0xff]
    %v2114 = vld [vmem:[#allocation9 + $0x1d0] sm:$0xff]
    %v2115 = vld [vmem:[#allocation9 + $0x1d8] sm:$0xff]
    %v2116 = vld [vmem:[#allocation9 + $0x1e0] sm:$0xff]
    %v2117 = vld [vmem:[#allocation9 + $0x1e8] sm:$0xff]
    %v2118 = vld [vmem:[#allocation9 + $0x1f0] sm:$0xff]
    %v2119 = vld [vmem:[#allocation9 + $0x1f8] sm:$0xff]
    %v2120 = vunpack.c.l.bf16 %v2056
    %v2121 = vunpack.c.h.bf16 %v2056
    %v2122 = vunpack.c.l.bf16 %v2057
    %v2123 = vunpack.c.h.bf16 %v2057
    %v2124 = vunpack.c.l.bf16 %v2058
    %v2125 = vunpack.c.h.bf16 %v2058
    %v2126 = vunpack.c.l.bf16 %v2059
    %v2127 = vunpack.c.h.bf16 %v2059
    %v2128 = vunpack.c.l.bf16 %v2060
    %v2129 = vunpack.c.h.bf16 %v2060
    %v2130 = vunpack.c.l.bf16 %v2061
    %v2131 = vunpack.c.h.bf16 %v2061
    %v2132 = vunpack.c.l.bf16 %v2062
    %v2133 = vunpack.c.h.bf16 %v2062
    %v2134 = vunpack.c.l.bf16 %v2063
    %v2135 = vunpack.c.h.bf16 %v2063
    %v2136 = vunpack.c.l.bf16 %v2064
    %v2137 = vunpack.c.h.bf16 %v2064
    %v2138 = vunpack.c.l.bf16 %v2065
    %v2139 = vunpack.c.h.bf16 %v2065
    %v2140 = vunpack.c.l.bf16 %v2066
    %v2141 = vunpack.c.h.bf16 %v2066
    %v2142 = vunpack.c.l.bf16 %v2067
    %v2143 = vunpack.c.h.bf16 %v2067
    %v2144 = vunpack.c.l.bf16 %v2068
    %v2145 = vunpack.c.h.bf16 %v2068
    %v2146 = vunpack.c.l.bf16 %v2069
    %v2147 = vunpack.c.h.bf16 %v2069
    %v2148 = vunpack.c.l.bf16 %v2070
    %v2149 = vunpack.c.h.bf16 %v2070
    %v2150 = vunpack.c.l.bf16 %v2071
    %v2151 = vunpack.c.h.bf16 %v2071
    %v2152 = vunpack.c.l.bf16 %v2072
    %v2153 = vunpack.c.h.bf16 %v2072
    %v2154 = vunpack.c.l.bf16 %v2073
    %v2155 = vunpack.c.h.bf16 %v2073
    %v2156 = vunpack.c.l.bf16 %v2074
    %v2157 = vunpack.c.h.bf16 %v2074
    %v2158 = vunpack.c.l.bf16 %v2075
    %v2159 = vunpack.c.h.bf16 %v2075
    %v2160 = vunpack.c.l.bf16 %v2076
    %v2161 = vunpack.c.h.bf16 %v2076
    %v2162 = vunpack.c.l.bf16 %v2077
    %v2163 = vunpack.c.h.bf16 %v2077
    %v2164 = vunpack.c.l.bf16 %v2078
    %v2165 = vunpack.c.h.bf16 %v2078
    %v2166 = vunpack.c.l.bf16 %v2079
    %v2167 = vunpack.c.h.bf16 %v2079
    %v2168 = vunpack.c.l.bf16 %v2080
    %v2169 = vunpack.c.h.bf16 %v2080
    %v2170 = vunpack.c.l.bf16 %v2081
    %v2171 = vunpack.c.h.bf16 %v2081
    %v2172 = vunpack.c.l.bf16 %v2082
    %v2173 = vunpack.c.h.bf16 %v2082
    %v2174 = vunpack.c.l.bf16 %v2083
    %v2175 = vunpack.c.h.bf16 %v2083
    %v2176 = vunpack.c.l.bf16 %v2084
    %v2177 = vunpack.c.h.bf16 %v2084
    %v2178 = vunpack.c.l.bf16 %v2085
    %v2179 = vunpack.c.h.bf16 %v2085
    %v2180 = vunpack.c.l.bf16 %v2086
    %v2181 = vunpack.c.h.bf16 %v2086
    %v2182 = vunpack.c.l.bf16 %v2087
    %v2183 = vunpack.c.h.bf16 %v2087
    %v2184 = vunpack.c.l.bf16 %v2088
    %v2185 = vunpack.c.h.bf16 %v2088
    %v2186 = vunpack.c.l.bf16 %v2089
    %v2187 = vunpack.c.h.bf16 %v2089
    %v2188 = vunpack.c.l.bf16 %v2090
    %v2189 = vunpack.c.h.bf16 %v2090
    %v2190 = vunpack.c.l.bf16 %v2091
    %v2191 = vunpack.c.h.bf16 %v2091
    %v2192 = vunpack.c.l.bf16 %v2092
    %v2193 = vunpack.c.h.bf16 %v2092
    %v2194 = vunpack.c.l.bf16 %v2093
    %v2195 = vunpack.c.h.bf16 %v2093
    %v2196 = vunpack.c.l.bf16 %v2094
    %v2197 = vunpack.c.h.bf16 %v2094
    %v2198 = vunpack.c.l.bf16 %v2095
    %v2199 = vunpack.c.h.bf16 %v2095
    %v2200 = vunpack.c.l.bf16 %v2096
    %v2201 = vunpack.c.h.bf16 %v2096
    %v2202 = vunpack.c.l.bf16 %v2097
    %v2203 = vunpack.c.h.bf16 %v2097
    %v2204 = vunpack.c.l.bf16 %v2098
    %v2205 = vunpack.c.h.bf16 %v2098
    %v2206 = vunpack.c.l.bf16 %v2099
    %v2207 = vunpack.c.h.bf16 %v2099
    %v2208 = vunpack.c.l.bf16 %v2100
    %v2209 = vunpack.c.h.bf16 %v2100
    %v2210 = vunpack.c.l.bf16 %v2101
    %v2211 = vunpack.c.h.bf16 %v2101
    %v2212 = vunpack.c.l.bf16 %v2102
    %v2213 = vunpack.c.h.bf16 %v2102
    %v2214 = vunpack.c.l.bf16 %v2103
    %v2215 = vunpack.c.h.bf16 %v2103
    %v2216 = vunpack.c.l.bf16 %v2104
    %v2217 = vunpack.c.h.bf16 %v2104
    %v2218 = vunpack.c.l.bf16 %v2105
    %v2219 = vunpack.c.h.bf16 %v2105
    %v2220 = vunpack.c.l.bf16 %v2106
    %v2221 = vunpack.c.h.bf16 %v2106
    %v2222 = vunpack.c.l.bf16 %v2107
    %v2223 = vunpack.c.h.bf16 %v2107
    %v2224 = vunpack.c.l.bf16 %v2108
    %v2225 = vunpack.c.h.bf16 %v2108
    %v2226 = vunpack.c.l.bf16 %v2109
    %v2227 = vunpack.c.h.bf16 %v2109
    %v2228 = vunpack.c.l.bf16 %v2110
    %v2229 = vunpack.c.h.bf16 %v2110
    %v2230 = vunpack.c.l.bf16 %v2111
    %v2231 = vunpack.c.h.bf16 %v2111
    %v2232 = vunpack.c.l.bf16 %v2112
    %v2233 = vunpack.c.h.bf16 %v2112
    %v2234 = vunpack.c.l.bf16 %v2113
    %v2235 = vunpack.c.h.bf16 %v2113
    %v2236 = vunpack.c.l.bf16 %v2114
    %v2237 = vunpack.c.h.bf16 %v2114
    %v2238 = vunpack.c.l.bf16 %v2115
    %v2239 = vunpack.c.h.bf16 %v2115
    %v2240 = vunpack.c.l.bf16 %v2116
    %v2241 = vunpack.c.h.bf16 %v2116
    %v2242 = vunpack.c.l.bf16 %v2117
    %v2243 = vunpack.c.h.bf16 %v2117
    %v2244 = vunpack.c.l.bf16 %v2118
    %v2245 = vunpack.c.h.bf16 %v2118
    %v2246 = vunpack.c.l.bf16 %v2119
    %v2247 = vunpack.c.h.bf16 %v2119
    %v2248 = vld [vmem:[%s7] sm:$0x3]
    %v2250 = vlaneseq
    %v2251 = vshrl.u32 %v2250, 7
    %v2252 = vsub.s32 0, %v2251
    %v2253 = vrot.slane %v2248, %v2252
    %v2254 = vlaneseq
    %v2255 = vshrl.u32 %v2254, 7
    %v2256 = vsub.s32 1, %v2255
    %v2257 = vrot.slane %v2248, %v2256
    %2260 = vmatprep.subr.mxu0 %v2121
    %2261 = vmatpush1.msra.mxu0 %v2120
    %2262 = vmatprep.subr.mxu0 %v2123
    %2263 = vmatpush1.msra.mxu0 %v2122
    %2264 = vmatprep.subr.mxu0 %v2125
    %2265 = vmatpush1.msra.mxu0 %v2124
    %2266 = vmatprep.subr.mxu0 %v2127
    %2267 = vmatpush1.msra.mxu0 %v2126
    %2268 = vmatprep.subr.mxu0 %v2129
    %2269 = vmatpush1.msra.mxu0 %v2128
    %2270 = vmatprep.subr.mxu0 %v2131
    %2271 = vmatpush1.msra.mxu0 %v2130
    %2272 = vmatprep.subr.mxu0 %v2133
    %2273 = vmatpush1.msra.mxu0 %v2132
    %2274 = vmatprep.subr.mxu0 %v2135
    %2275 = vmatpush1.msra.mxu0 %v2134
    %2276 = vmatprep.subr.mxu0 %v2137
    %2277 = vmatpush1.msra.mxu0 %v2136
    %2278 = vmatprep.subr.mxu0 %v2139
    %2279 = vmatpush1.msra.mxu0 %v2138
    %2280 = vmatprep.subr.mxu0 %v2141
    %2281 = vmatpush1.msra.mxu0 %v2140
    %2282 = vmatprep.subr.mxu0 %v2143
    %2283 = vmatpush1.msra.mxu0 %v2142
    %2284 = vmatprep.subr.mxu0 %v2145
    %2285 = vmatpush1.msra.mxu0 %v2144
    %2286 = vmatprep.subr.mxu0 %v2147
    %2287 = vmatpush1.msra.mxu0 %v2146
    %2288 = vmatprep.subr.mxu0 %v2149
    %2289 = vmatpush1.msra.mxu0 %v2148
    %2290 = vmatprep.subr.mxu0 %v2151
    %2291 = vmatpush1.msra.mxu0 %v2150
    %2292 = vmatprep.subr.mxu0 %v2153
    %2293 = vmatpush1.msra.mxu0 %v2152
    %2294 = vmatprep.subr.mxu0 %v2155
    %2295 = vmatpush1.msra.mxu0 %v2154
    %2296 = vmatprep.subr.mxu0 %v2157
    %2297 = vmatpush1.msra.mxu0 %v2156
    %2298 = vmatprep.subr.mxu0 %v2159
    %2299 = vmatpush1.msra.mxu0 %v2158
    %2300 = vmatprep.subr.mxu0 %v2161
    %2301 = vmatpush1.msra.mxu0 %v2160
    %2302 = vmatprep.subr.mxu0 %v2163
    %2303 = vmatpush1.msra.mxu0 %v2162
    %2304 = vmatprep.subr.mxu0 %v2165
    %2305 = vmatpush1.msra.mxu0 %v2164
    %2306 = vmatprep.subr.mxu0 %v2167
    %2307 = vmatpush1.msra.mxu0 %v2166
    %2308 = vmatprep.subr.mxu0 %v2169
    %2309 = vmatpush1.msra.mxu0 %v2168
    %2310 = vmatprep.subr.mxu0 %v2171
    %2311 = vmatpush1.msra.mxu0 %v2170
    %2312 = vmatprep.subr.mxu0 %v2173
    %2313 = vmatpush1.msra.mxu0 %v2172
    %2314 = vmatprep.subr.mxu0 %v2175
    %2315 = vmatpush1.msra.mxu0 %v2174
    %2316 = vmatprep.subr.mxu0 %v2177
    %2317 = vmatpush1.msra.mxu0 %v2176
    %2318 = vmatprep.subr.mxu0 %v2179
    %2319 = vmatpush1.msra.mxu0 %v2178
    %2320 = vmatprep.subr.mxu0 %v2181
    %2321 = vmatpush1.msra.mxu0 %v2180
    %2322 = vmatprep.subr.mxu0 %v2183
    %2323 = vmatpush1.msra.mxu0 %v2182
    %2324 = vmatprep.mubr.f32.mxu0 %v2053
    %2325 = vmatmul.mubr.f32.gmra.mrb[0].mxu0 %v2052
    %v2326 = vpop.f32.mrb[0].mxu0
    %v2327 = vadd.f32 %v2253, %v2326
    %v2328 = vpop.f32.mrb[0].mxu0
    %v2329 = vadd.f32 %v2257, %v2328
    %2330 = vdwg.mxu0
    %2331 = vmatprep.subr.mxu0 %v2185
    %2332 = vmatpush1.msra.mxu0 %v2184
    %2333 = vmatprep.subr.mxu0 %v2187
    %2334 = vmatpush1.msra.mxu0 %v2186
    %2335 = vmatprep.subr.mxu0 %v2189
    %2336 = vmatpush1.msra.mxu0 %v2188
    %2337 = vmatprep.subr.mxu0 %v2191
    %2338 = vmatpush1.msra.mxu0 %v2190
    %2339 = vmatprep.subr.mxu0 %v2193
    %2340 = vmatpush1.msra.mxu0 %v2192
    %2341 = vmatprep.subr.mxu0 %v2195
    %2342 = vmatpush1.msra.mxu0 %v2194
    %2343 = vmatprep.subr.mxu0 %v2197
    %2344 = vmatpush1.msra.mxu0 %v2196
    %2345 = vmatprep.subr.mxu0 %v2199
    %2346 = vmatpush1.msra.mxu0 %v2198
    %2347 = vmatprep.subr.mxu0 %v2201
    %2348 = vmatpush1.msra.mxu0 %v2200
    %2349 = vmatprep.subr.mxu0 %v2203
    %2350 = vmatpush1.msra.mxu0 %v2202
    %2351 = vmatprep.subr.mxu0 %v2205
    %2352 = vmatpush1.msra.mxu0 %v2204
    %2353 = vmatprep.subr.mxu0 %v2207
    %2354 = vmatpush1.msra.mxu0 %v2206
    %2355 = vmatprep.subr.mxu0 %v2209
    %2356 = vmatpush1.msra.mxu0 %v2208
    %2357 = vmatprep.subr.mxu0 %v2211
    %2358 = vmatpush1.msra.mxu0 %v2210
    %2359 = vmatprep.subr.mxu0 %v2213
    %2360 = vmatpush1.msra.mxu0 %v2212
    %2361 = vmatprep.subr.mxu0 %v2215
    %2362 = vmatpush1.msra.mxu0 %v2214
    %2363 = vmatprep.subr.mxu0 %v2217
    %2364 = vmatpush1.msra.mxu0 %v2216
    %2365 = vmatprep.subr.mxu0 %v2219
    %2366 = vmatpush1.msra.mxu0 %v2218
    %2367 = vmatprep.subr.mxu0 %v2221
    %2368 = vmatpush1.msra.mxu0 %v2220
    %2369 = vmatprep.subr.mxu0 %v2223
    %2370 = vmatpush1.msra.mxu0 %v2222
    %2371 = vmatprep.subr.mxu0 %v2225
    %2372 = vmatpush1.msra.mxu0 %v2224
    %2373 = vmatprep.subr.mxu0 %v2227
    %2374 = vmatpush1.msra.mxu0 %v2226
    %2375 = vmatprep.subr.mxu0 %v2229
    %2376 = vmatpush1.msra.mxu0 %v2228
    %2377 = vmatprep.subr.mxu0 %v2231
    %2378 = vmatpush1.msra.mxu0 %v2230
    %2379 = vmatprep.subr.mxu0 %v2233
    %2380 = vmatpush1.msra.mxu0 %v2232
    %2381 = vmatprep.subr.mxu0 %v2235
    %2382 = vmatpush1.msra.mxu0 %v2234
    %2383 = vmatprep.subr.mxu0 %v2237
    %2384 = vmatpush1.msra.mxu0 %v2236
    %2385 = vmatprep.subr.mxu0 %v2239
    %2386 = vmatpush1.msra.mxu0 %v2238
    %2387 = vmatprep.subr.mxu0 %v2241
    %2388 = vmatpush1.msra.mxu0 %v2240
    %2389 = vmatprep.subr.mxu0 %v2243
    %2390 = vmatpush1.msra.mxu0 %v2242
    %2391 = vmatprep.subr.mxu0 %v2245
    %2392 = vmatpush1.msra.mxu0 %v2244
    %2393 = vmatprep.subr.mxu0 %v2247
    %2394 = vmatpush1.msra.mxu0 %v2246
    %2395 = vmatprep.mubr.f32.mxu0 %v2055
    %2396 = vmatmul.mubr.f32.gmra.mrb[0].mxu0 %v2054
    %v2397 = vpop.f32.mrb[0].mxu0
    %v2398 = vadd.f32 %v2327, %v2397
    %v2399 = vpop.f32.mrb[0].mxu0
    %v2400 = vadd.f32 %v2329, %v2399
    %2401 = vdwg.mxu0
    %vm2402 = vcmp.gt.f32.partialorder %v2398, 0.0
    %vm2403 = vcmp.gt.f32.partialorder %v2400, 0.0
    %v2404 = vmul.f32 %v2398, 0.2
    %v2405 = vmul.f32 %v2400, 0.2
    %v2406 = vsel %vm2402, %v2398, %v2404
    %v2407 = vsel %vm2403, %v2400, %v2405
    %s2408 = sadd.s32 %s103, 1209535159
    %v2409 = vstv %s2408
    %v2410 = vxor.u32 %v530, %v2409
    %v2411 = vxor.u32 %v531, %v2409
    %v2412 = vshrl.u32 %v2410, 16
    %v2413 = vshrl.u32 %v2411, 16
    %v2414 = vxor.u32 %v2410, %v2412
    %v2415 = vxor.u32 %v2411, %v2413
    %v2416 = vmul.u32 %v2414, 2146121005
    %v2417 = vmul.u32 %v2415, 2146121005
    %v2418 = vshrl.u32 %v2416, 15
    %v2419 = vshrl.u32 %v2417, 15
    %v2420 = vxor.u32 %v2416, %v2418
    %v2421 = vxor.u32 %v2417, %v2419
    %v2422 = vmul.u32 %v2420, 2221713035
    %v2423 = vmul.u32 %v2421, 2221713035
    %v2424 = vshrl.u32 %v2422, 16
    %v2425 = vshrl.u32 %v2423, 16
    %v2426 = vxor.u32 %v2422, %v2424
    %v2427 = vxor.u32 %v2423, %v2425
    %vm2428 = vcmp.ge.u32.totalorder %v2426, 1288490188
    %vm2429 = vcmp.ge.u32.totalorder %v2427, 1288490188
    %v2430 = vmul.f32 %v2406, 1.4285715
    %v2431 = vmul.f32 %v2407, 1.4285715
    %v2432 = vsel %vm2428, %v2430, 0.0
    %v2433 = vsel %vm2429, %v2431, 0.0
    %v2434 = vld [vmem:[#allocation11] sm:$0xf]
    %v2435 = vld [vmem:[#allocation11 + $0x4] sm:$0xf]
    %v2436 = vld [vmem:[#allocation11 + $0x8] sm:$0xf]
    %v2437 = vld [vmem:[#allocation11 + $0xc] sm:$0xf]
    %v2438 = vld [vmem:[#allocation11 + $0x10] sm:$0xf]
    %v2439 = vld [vmem:[#allocation11 + $0x14] sm:$0xf]
    %v2440 = vld [vmem:[#allocation11 + $0x18] sm:$0xf]
    %v2441 = vld [vmem:[#allocation11 + $0x1c] sm:$0xf]
    %v2442 = vld [vmem:[#allocation11 + $0x20] sm:$0xf]
    %v2443 = vld [vmem:[#allocation11 + $0x24] sm:$0xf]
    %v2444 = vld [vmem:[#allocation11 + $0x28] sm:$0xf]
    %v2445 = vld [vmem:[#allocation11 + $0x2c] sm:$0xf]
    %v2446 = vld [vmem:[#allocation11 + $0x30] sm:$0xf]
    %v2447 = vld [vmem:[#allocation11 + $0x34] sm:$0xf]
    %v2448 = vld [vmem:[#allocation11 + $0x38] sm:$0xf]
    %v2449 = vld [vmem:[#allocation11 + $0x3c] sm:$0xf]
    %v2450 = vld [vmem:[#allocation11 + $0x40] sm:$0xf]
    %v2451 = vld [vmem:[#allocation11 + $0x44] sm:$0xf]
    %v2452 = vld [vmem:[#allocation11 + $0x48] sm:$0xf]
    %v2453 = vld [vmem:[#allocation11 + $0x4c] sm:$0xf]
    %v2454 = vld [vmem:[#allocation11 + $0x50] sm:$0xf]
    %v2455 = vld [vmem:[#allocation11 + $0x54] sm:$0xf]
    %v2456 = vld [vmem:[#allocation11 + $0x58] sm:$0xf]
    %v2457 = vld [vmem:[#allocation11 + $0x5c] sm:$0xf]
    %v2458 = vld [vmem:[#allocation11 + $0x60] sm:$0xf]
    %v2459 = vld [vmem:[#allocation11 + $0x64] sm:$0xf]
    %v2460 = vld [vmem:[#allocation11 + $0x68] sm:$0xf]
    %v2461 = vld [vmem:[#allocation11 + $0x6c] sm:$0xf]
    %v2462 = vld [vmem:[#allocation11 + $0x70] sm:$0xf]
    %v2463 = vld [vmem:[#allocation11 + $0x74] sm:$0xf]
    %v2464 = vld [vmem:[#allocation11 + $0x78] sm:$0xf]
    %v2465 = vld [vmem:[#allocation11 + $0x7c] sm:$0xf]
    %v2466 = vunpack.c.l.bf16 %v2434
    %v2467 = vunpack.c.l.bf16 %v2435
    %v2468 = vunpack.c.l.bf16 %v2436
    %v2469 = vunpack.c.l.bf16 %v2437
    %v2470 = vunpack.c.l.bf16 %v2438
    %v2471 = vunpack.c.l.bf16 %v2439
    %v2472 = vunpack.c.l.bf16 %v2440
    %v2473 = vunpack.c.l.bf16 %v2441
    %v2474 = vunpack.c.l.bf16 %v2442
    %v2475 = vunpack.c.l.bf16 %v2443
    %v2476 = vunpack.c.l.bf16 %v2444
    %v2477 = vunpack.c.l.bf16 %v2445
    %v2478 = vunpack.c.l.bf16 %v2446
    %v2479 = vunpack.c.l.bf16 %v2447
    %v2480 = vunpack.c.l.bf16 %v2448
    %v2481 = vunpack.c.l.bf16 %v2449
    %v2482 = vunpack.c.l.bf16 %v2450
    %v2483 = vunpack.c.l.bf16 %v2451
    %v2484 = vunpack.c.l.bf16 %v2452
    %v2485 = vunpack.c.l.bf16 %v2453
    %v2486 = vunpack.c.l.bf16 %v2454
    %v2487 = vunpack.c.l.bf16 %v2455
    %v2488 = vunpack.c.l.bf16 %v2456
    %v2489 = vunpack.c.l.bf16 %v2457
    %v2490 = vunpack.c.l.bf16 %v2458
    %v2491 = vunpack.c.l.bf16 %v2459
    %v2492 = vunpack.c.l.bf16 %v2460
    %v2493 = vunpack.c.l.bf16 %v2461
    %v2494 = vunpack.c.l.bf16 %v2462
    %v2495 = vunpack.c.l.bf16 %v2463
    %v2496 = vunpack.c.l.bf16 %v2464
    %v2497 = vunpack.c.l.bf16 %v2465
    %v2498 = vld [vmem:[%s9] sm:$0x1]
    %v2500 = vlaneseq
    %v2501 = vshrl.u32 %v2500, 7
    %v2502 = vsub.s32 0, %v2501
    %v2503 = vrot.slane %v2498, %v2502
    %2505 = vmatprep.subr.mxu0 0.0
    %2506 = vmatpush1.msra.mxu0 %v2466
    %2507 = vmatprep.subr.mxu0 0.0
    %2508 = vmatpush1.msra.mxu0 %v2467
    %2509 = vmatprep.subr.mxu0 0.0
    %2510 = vmatpush1.msra.mxu0 %v2468
    %2511 = vmatprep.subr.mxu0 0.0
    %2512 = vmatpush1.msra.mxu0 %v2469
    %2513 = vmatprep.subr.mxu0 0.0
    %2514 = vmatpush1.msra.mxu0 %v2470
    %2515 = vmatprep.subr.mxu0 0.0
    %2516 = vmatpush1.msra.mxu0 %v2471
    %2517 = vmatprep.subr.mxu0 0.0
    %2518 = vmatpush1.msra.mxu0 %v2472
    %2519 = vmatprep.subr.mxu0 0.0
    %2520 = vmatpush1.msra.mxu0 %v2473
    %2521 = vmatprep.subr.mxu0 0.0
    %2522 = vmatpush1.msra.mxu0 %v2474
    %2523 = vmatprep.subr.mxu0 0.0
    %2524 = vmatpush1.msra.mxu0 %v2475
    %2525 = vmatprep.subr.mxu0 0.0
    %2526 = vmatpush1.msra.mxu0 %v2476
    %2527 = vmatprep.subr.mxu0 0.0
    %2528 = vmatpush1.msra.mxu0 %v2477
    %2529 = vmatprep.subr.mxu0 0.0
    %2530 = vmatpush1.msra.mxu0 %v2478
    %2531 = vmatprep.subr.mxu0 0.0
    %2532 = vmatpush1.msra.mxu0 %v2479
    %2533 = vmatprep.subr.mxu0 0.0
    %2534 = vmatpush1.msra.mxu0 %v2480
    %2535 = vmatprep.subr.mxu0 0.0
    %2536 = vmatpush1.msra.mxu0 %v2481
    %2537 = vmatprep.subr.mxu0 0.0
    %2538 = vmatpush1.msra.mxu0 %v2482
    %2539 = vmatprep.subr.mxu0 0.0
    %2540 = vmatpush1.msra.mxu0 %v2483
    %2541 = vmatprep.subr.mxu0 0.0
    %2542 = vmatpush1.msra.mxu0 %v2484
    %2543 = vmatprep.subr.mxu0 0.0
    %2544 = vmatpush1.msra.mxu0 %v2485
    %2545 = vmatprep.subr.mxu0 0.0
    %2546 = vmatpush1.msra.mxu0 %v2486
    %2547 = vmatprep.subr.mxu0 0.0
    %2548 = vmatpush1.msra.mxu0 %v2487
    %2549 = vmatprep.subr.mxu0 0.0
    %2550 = vmatpush1.msra.mxu0 %v2488
    %2551 = vmatprep.subr.mxu0 0.0
    %2552 = vmatpush1.msra.mxu0 %v2489
    %2553 = vmatprep.subr.mxu0 0.0
    %2554 = vmatpush1.msra.mxu0 %v2490
    %2555 = vmatprep.subr.mxu0 0.0
    %2556 = vmatpush1.msra.mxu0 %v2491
    %2557 = vmatprep.subr.mxu0 0.0
    %2558 = vmatpush1.msra.mxu0 %v2492
    %2559 = vmatprep.subr.mxu0 0.0
    %2560 = vmatpush1.msra.mxu0 %v2493
    %2561 = vmatprep.subr.mxu0 0.0
    %2562 = vmatpush1.msra.mxu0 %v2494
    %2563 = vmatprep.subr.mxu0 0.0
    %2564 = vmatpush1.msra.mxu0 %v2495
    %2565 = vmatprep.subr.mxu0 0.0
    %2566 = vmatpush1.msra.mxu0 %v2496
    %2567 = vmatprep.subr.mxu0 0.0
    %2568 = vmatpush1.msra.mxu0 %v2497
    %2569 = vmatprep.mubr.f32.mxu0 %v2433
    %2570 = vmatmul.mubr.f32.gmra.mrb[0].mxu0 %v2432
    %v2571 = vpop.f32.mrb[0].mxu0
    %v2572 = vadd.f32 %v2503, %v2571
    %v2573 = vpop.f32.mrb[0].mxu0
    %2574 = vdwg.mxu0
    %v2575 = vxor.u32 %v2572, 2147483648
    %v2576 = vmul.f32 %v2575, 1.442695
    %v2577 = vpow.pop %v2576
    %v2578 = vadd.f32 %v2577, 1.0
    %v2579 = vrcp.pop %v2578
    %v2580 = vmul.f32 1.0, %v2579
    %2581 = vst [vmem:[#allocation12] sm:$0xff] %v2580
    // Predicated region
    $region62: #{tpu_custom_call.1} parent=1 // pred_check
      _
    $region63: #{tpu_custom_call.1} parent=1 // pred_check_branch
      %2583 = sbr.rel (0) target = $region65
    $region64: #{tpu_custom_call.1} parent=1 // pred_region
      %s2585 = ssub.s32 128, 128
      %2586 = vsyncadd [#allocation5], %s2585
      %s2588 = sshll.u32 [#allocation12], 4
      %s2589 = int_to_ptr.vmem [resolvable:$true] %s2588
      %2591 = dma.vmem_to_hbm [thread:$0]  %s2589, 128, %s10, [#allocation5]
    $region65: #{tpu_custom_call.1} parent=1 // pred_fallthru
      _
    // Predicated region
    $region66: #{tpu_custom_call.1} parent=1 // pred_check
      _
    $region67: #{tpu_custom_call.1} parent=1 // pred_check_branch
      %2593 = sbr.rel (0) target = $region69
    $region68: #{tpu_custom_call.1} parent=1 // pred_region
      %2594 = dma.done [#allocation5], 128
    $region69: #{tpu_custom_call.1} parent=1 // pred_fallthru
      _
    %2595 = vsyncpa [#allocation4], 1
    %2596 = vsyncpa [#allocation7], 1
    %2597 = vsyncpa [#allocation10], 1
    %2598 = vsyncpa [#allocation5], 1

</llo_original>
